<compile_context>
chip_gen: v7x
topology: tpu7x:2x2x1
jax: 0.10.0
libtpu: 0.0.40
codegen_flags: <defaults>
</compile_context>

<pallas_src>
import jax
import jax.numpy as jnp
from jax import lax
from jax.experimental import pallas as pl
from jax.experimental.pallas import tpu as pltpu


# -----------------------------------------------------------------------------
# Fused kernel body: all CenterNet head branches for one batch element.
# -----------------------------------------------------------------------------
def _make_fused_heads_kernel(Cin, H, W, HW, pad_l, Cc, Ci, Ch_total,
                             has_conv, has_id):
    """Ref layout (channels on sublanes, H*W on lanes):

      x_ref   : (1, Cin, HW)
      conv    : w1_ref (9, Ch_total, Cin), b1_ref (Ch_total, 1),
                w2c_ref (Cc, Ch_total),    b2c_ref (Cc, 1)
      ident   : w2i_ref (Ci, Cin),         b2i_ref (Ci, 1)
      out_ref : (1, Cc + Ci, HW)            (conv-head rows first)
      scratch : xp_ref (Cin, HW + 2*pad_l), acc_ref (Ch_total, HW) f32,
                hid_ref (Ch_total, HW) compute-dtype
    """
    taps = tuple((dy, dx) for dy in (-1, 0, 1) for dx in (-1, 0, 1))

    def kernel(*refs):
        i = 0
        x_ref = refs[i]; i += 1
        if has_conv:
            w1_ref, b1_ref, w2c_ref, b2c_ref = refs[i:i + 4]; i += 4
        if has_id:
            w2i_ref, b2i_ref = refs[i:i + 2]; i += 2
        out_ref = refs[i]; i += 1
        if has_conv:
            xp_ref, acc_ref, hid_ref = refs[i:i + 3]

        xf = x_ref[0]                                        # (Cin, HW)

        if has_conv:
            # Zero ONLY the halo stripes, then the aligned interior store.
            halo = jnp.zeros((Cin, pad_l), dtype=xf.dtype)
            xp_ref[:, :pad_l] = halo
            xp_ref[:, pad_l + HW:] = halo
            xp_ref[:, pad_l:pad_l + HW] = xf

            # Column index (one-time constant on (1, HW)).  Row masks are not
            # needed: the zero halo covers every out-of-image row access.
            col = lax.broadcasted_iota(jnp.int32, (1, HW), 1) % W
            ok_m1 = col >= 1            # dx = -1 tap valid here
            ok_p1 = col <= (W - 2)      # dx = +1 tap valid here

            # 3x3 conv as 9 accumulated shifted matmuls (no im2col patch).
            for t, (dy, dx) in enumerate(taps):
                d = dy * W + dx
                tap = xp_ref[:, pad_l + d:pad_l + d + HW]    # lane-shifted view
                if dx == -1:
                    tap = jnp.where(ok_m1, tap, jnp.zeros_like(tap))
                elif dx == 1:
                    tap = jnp.where(ok_p1, tap, jnp.zeros_like(tap))
                contrib = jnp.dot(w1_ref[t], tap,
                                  preferred_element_type=jnp.float32)
                if t == 0:
                    acc_ref[...] = contrib
                else:
                    acc_ref[...] += contrib

            # bias + ReLU -> explicit VMEM scratch (downcast here if bf16).
            hid_ref[...] = jnp.maximum(acc_ref[...] + b1_ref[...],
                                       0.0).astype(hid_ref.dtype)

            # All conv heads' 1x1 convs: ONE block-diagonal matmul.
            oc = jnp.dot(w2c_ref[...], hid_ref[...],
                         preferred_element_type=jnp.float32) + b2c_ref[...]
            out_ref[0, :Cc, :] = oc.astype(out_ref.dtype)

        if has_id:
            # All Identity heads' 1x1 convs: ONE stacked matmul on x.
            oi = jnp.dot(w2i_ref[...], xf,
                         preferred_element_type=jnp.float32) + b2i_ref[...]
            out_ref[0, Cc:Cc + Ci, :] = oi.astype(out_ref.dtype)

    return kernel


# -----------------------------------------------------------------------------
# Wrapper: one fused pallas_call for the whole CenterNetHead forward pass.
# -----------------------------------------------------------------------------
def centernet_head_forward(x_nchw, heads_params, *, compute_dtype=None):
    """CenterNetHead.forward: dict name -> (N, Cout, H, W)."""
    N, Cin, H, W = x_nchw.shape
    HW = H * W
    out_dtype = x_nchw.dtype
    cdtype = out_dtype if compute_dtype is None else compute_dtype
    x_flat = x_nchw.reshape(N, Cin, HW).astype(cdtype)   # contiguous, no transpose

    names = list(heads_params.keys())
    conv_heads = [(n, heads_params[n]) for n in names if "w1" in heads_params[n]]
    id_heads = [(n, heads_params[n]) for n in names if "w1" not in heads_params[n]]
    has_conv, has_id = bool(conv_heads), bool(id_heads)

    inputs = [x_flat]
    in_specs = [pl.BlockSpec((1, Cin, HW), lambda n: (n, 0, 0))]

    Ch_total = Cc = Ci = 0
    if has_conv:
        chs = [p["w1"].shape[0] for _, p in conv_heads]
        couts_c = [p["w2"].shape[0] for _, p in conv_heads]
        Ch_total, Cc = sum(chs), sum(couts_c)
        # torch OIHW (Ch, Cin, 3, 3) -> per-tap stack (9, Ch_total, Cin)
        w1_tap = jnp.concatenate(
            [jnp.transpose(p["w1"], (2, 3, 0, 1)).reshape(9, ch, Cin)
             for (_, p), ch in zip(conv_heads, chs)], axis=1).astype(cdtype)
        b1_all = jnp.concatenate(
            [p["b1"].reshape(-1, 1) for _, p in conv_heads], 0).astype(jnp.float32)
        # Block-diagonal fused 1x1 weights for all conv heads.
        w2c = jnp.zeros((Cc, Ch_total), jnp.float32)
        ro = co = 0
        for (_, p), ch, o in zip(conv_heads, chs, couts_c):
            w2c = w2c.at[ro:ro + o, co:co + ch].set(p["w2"].reshape(o, ch))
            ro += o
            co += ch
        w2c = w2c.astype(cdtype)
        b2c = jnp.concatenate(
            [p["b2"].reshape(-1, 1) for _, p in conv_heads], 0).astype(jnp.float32)
        inputs += [w1_tap, b1_all, w2c, b2c]
        in_specs += [pl.BlockSpec(w1_tap.shape, lambda n: (0, 0, 0)),
                     pl.BlockSpec(b1_all.shape, lambda n: (0, 0)),
                     pl.BlockSpec(w2c.shape, lambda n: (0, 0)),
                     pl.BlockSpec(b2c.shape, lambda n: (0, 0))]
    if has_id:
        couts_i = [p["w2"].shape[0] for _, p in id_heads]
        Ci = sum(couts_i)
        w2i = jnp.concatenate(
            [p["w2"].reshape(o, Cin) for (_, p), o in zip(id_heads, couts_i)],
            0).astype(cdtype)
        b2i = jnp.concatenate(
            [p["b2"].reshape(-1, 1) for _, p in id_heads], 0).astype(jnp.float32)
        inputs += [w2i, b2i]
        in_specs += [pl.BlockSpec(w2i.shape, lambda n: (0, 0)),
                     pl.BlockSpec(b2i.shape, lambda n: (0, 0))]

    Cout_total = Cc + Ci
    pad_l = -(-(W + 1) // 128) * 128          # 128-aligned halo, >= W+1

    scratch = []
    if has_conv:
        scratch = [pltpu.VMEM((Cin, HW + 2 * pad_l), cdtype),   # haloed flat x
                   pltpu.VMEM((Ch_total, HW), jnp.float32),     # f32 conv acc
                   pltpu.VMEM((Ch_total, HW), cdtype)]          # ReLU'd hidden

    # Explicit scoped-VMEM budget: double-buffered I/O blocks + scratch + weights.
    csz = jnp.dtype(cdtype).itemsize
    osz = jnp.dtype(out_dtype).itemsize
    est = 2 * Cin * HW * csz + 2 * Cout_total * HW * osz
    if has_conv:
        est += Cin * (HW + 2 * pad_l) * csz + Ch_total * HW * (4 + csz)
        est += (9 * Ch_total * Cin + Cc * Ch_total) * csz + (Ch_total + Cc) * 4
    if has_id:
        est += Ci * Cin * csz + Ci * 4
    vmem_limit = int(min(max(2 * est, 8 << 20), 64 << 20))

    kernel = _make_fused_heads_kernel(Cin, H, W, HW, pad_l, Cc, Ci, Ch_total,
                                      has_conv, has_id)

    out_full = pl.pallas_call(
        kernel,
        out_shape=jax.ShapeDtypeStruct((N, Cout_total, HW), out_dtype),
        grid_spec=pltpu.PrefetchScalarGridSpec(
            num_scalar_prefetch=0,
            grid=(N,),                      # N parallel steps -> both v7x cores
            in_specs=in_specs,
            out_specs=pl.BlockSpec((1, Cout_total, HW), lambda n: (n, 0, 0)),
            scratch_shapes=scratch),
        compiler_params=pltpu.CompilerParams(
            dimension_semantics=("parallel",),
            vmem_limit_bytes=vmem_limit),
    )(*inputs)

    # Split the fused output rows back into per-head NCHW tensors
    # (conv-head rows first, then Identity-head rows; contiguous reshape only).
    rows = {}
    off = 0
    for n, p in conv_heads + id_heads:
        o = p["w2"].shape[0]
        rows[n] = (off, o)
        off += o
    return {n: out_full[:, rows[n][0]:rows[n][0] + rows[n][1]]
            .reshape(N, rows[n][1], H, W) for n in names}


# -----------------------------------------------------------------------------
# Deterministic parameter init (PyTorch Conv2d layouts: OIHW / OI11)
# -----------------------------------------------------------------------------
def init_head_block(key, in_channels, head_channels, out_channels, prior_bias=0.0):
    k1, k2, k3 = jax.random.split(key, 3)
    params = {}
    fc_in = in_channels
    if head_channels > 0:
        params["w1"] = 0.1 * jax.random.normal(
            k1, (head_channels, in_channels, 3, 3), jnp.float32)
        params["b1"] = 0.1 * jax.random.normal(k2, (head_channels,), jnp.float32)
        fc_in = head_channels
    params["w2"] = 0.1 * jax.random.normal(
        k3, (out_channels, fc_in, 1, 1), jnp.float32)
    params["b2"] = jnp.full((out_channels,), prior_bias, jnp.float32)
    return params


# -----------------------------------------------------------------------------
# Pure-JAX reference (matches the PyTorch HeadBlock / CenterNetHead forward)
# -----------------------------------------------------------------------------
def _ref_head_block(x_nchw, params):
    h = x_nchw
    if "w1" in params:
        h = lax.conv_general_dilated(
            h, params["w1"], window_strides=(1, 1), padding="SAME",
            dimension_numbers=("NCHW", "OIHW", "NCHW"))
        h = jnp.maximum(h + params["b1"][None, :, None, None], 0.0)
    w2 = params["w2"].reshape(params["w2"].shape[0], -1)
    y = jnp.einsum("nchw,oc->nohw", h, w2) + params["b2"][None, :, None, None]
    return y


if __name__ == "__main__":
    key = jax.random.PRNGKey(0)
    kx, kh, kw, ko = jax.random.split(key, 4)

    # NCHW input consistent with the module: (2, 4, 16, 16).
    N, Cin, H, W = 2, 4, 16, 16
    x_nchw = jax.random.normal(kx, (N, Cin, H, W), jnp.float32)

    # CenterNet-style branches: heatmap / wh / offset (offset uses Identity).
    branches = [
        dict(name="heatmap", head_channels=32, out_channels=3, prior_bias=-2.19),
        dict(name="wh", head_channels=32, out_channels=2, prior_bias=0.0),
        dict(name="offset", head_channels=0, out_channels=2, prior_bias=0.0),
    ]
    branch_keys = {"heatmap": kh, "wh": kw, "offset": ko}

    heads_params = {
        cfg["name"]: init_head_block(
            branch_keys[cfg["name"]], Cin, cfg["head_channels"],
            cfg["out_channels"], cfg["prior_bias"])
        for cfg in branches
    }

    outs = centernet_head_forward(x_nchw, heads_params)
    outs = jax.tree_util.tree_map(jax.block_until_ready, outs)

    # Verify against the pure-JAX reference.
    for name, params in heads_params.items():
        ref = _ref_head_block(x_nchw, params)
        assert outs[name].shape == ref.shape, name
        assert jnp.allclose(outs[name], ref, atol=1e-3, rtol=1e-3), name

    print("KERNEL_OK")
</pallas_src>

<mosaic_0001>
module attributes {stable_mosaic.version = 11 : i64} {
  func.func @kernel(%arg0: i32, %arg1: memref<1x4x256xf32, #tpu.memory_space<vmem>>, %arg2: memref<9x64x4xf32, #tpu.memory_space<vmem>>, %arg3: memref<64x1xf32, #tpu.memory_space<vmem>>, %arg4: memref<5x64xf32, #tpu.memory_space<vmem>>, %arg5: memref<5x1xf32, #tpu.memory_space<vmem>>, %arg6: memref<2x4xf32, #tpu.memory_space<vmem>>, %arg7: memref<2x1xf32, #tpu.memory_space<vmem>>, %arg8: memref<1x7x256xf32, #tpu.memory_space<vmem>>, %arg9: memref<4x512xf32, #tpu.memory_space<vmem>>, %arg10: memref<64x256xf32, #tpu.memory_space<vmem>>, %arg11: memref<64x256xf32, #tpu.memory_space<vmem>>) attributes {dimension_semantics = [#tpu.dimension_semantics<parallel>], iteration_bounds = array<i64: 2>, scalar_prefetch = 0 : i64, scratch_operands = 3 : i64, tpu.core_type = #tpu.core_type<tc>, window_params = [{transform_indices = @transform_0, window_bounds = array<i64: 1, 4, 256>}, {pipeline_mode = #tpu.pipeline_mode<synchronous>, transform_indices = @transform_1, window_bounds = array<i64: 9, 64, 4>}, {pipeline_mode = #tpu.pipeline_mode<synchronous>, transform_indices = @transform_2, window_bounds = array<i64: 64, 1>}, {pipeline_mode = #tpu.pipeline_mode<synchronous>, transform_indices = @transform_3, window_bounds = array<i64: 5, 64>}, {pipeline_mode = #tpu.pipeline_mode<synchronous>, transform_indices = @transform_4, window_bounds = array<i64: 5, 1>}, {pipeline_mode = #tpu.pipeline_mode<synchronous>, transform_indices = @transform_5, window_bounds = array<i64: 2, 4>}, {pipeline_mode = #tpu.pipeline_mode<synchronous>, transform_indices = @transform_6, window_bounds = array<i64: 2, 1>}, {transform_indices = @transform_7, window_bounds = array<i64: 1, 7, 256>}]} {
    %c0 = arith.constant 0 : index
    %c0_0 = arith.constant 0 : index
    %c0_1 = arith.constant 0 : index
    %0 = vector.load %arg1[%c0, %c0_0, %c0_1] : memref<1x4x256xf32, #tpu.memory_space<vmem>>, vector<1x4x256xf32>
    %1 = vector.shape_cast %0 : vector<1x4x256xf32> to vector<4x256xf32>
    %cst = arith.constant 0.000000e+00 : f32
    %2 = vector.broadcast %cst : f32 to vector<4x128xf32>
    %c0_2 = arith.constant 0 : index
    %c0_3 = arith.constant 0 : index
    %3 = vector.load %arg9[%c0_2, %c0_3] : memref<4x512xf32, #tpu.memory_space<vmem>>, vector<4x128xf32>
    tpu.vector_store %arg9[%c0_2, %c0_3], %2 {strides = array<i32>} : memref<4x512xf32, #tpu.memory_space<vmem>>, vector<4x128xf32>,
    %c0_4 = arith.constant 0 : index
    %c384 = arith.constant 384 : index
    %4 = vector.load %arg9[%c0_4, %c384] : memref<4x512xf32, #tpu.memory_space<vmem>>, vector<4x128xf32>
    tpu.vector_store %arg9[%c0_4, %c384], %2 {strides = array<i32>} : memref<4x512xf32, #tpu.memory_space<vmem>>, vector<4x128xf32>,
    %c0_5 = arith.constant 0 : index
    %c128 = arith.constant 128 : index
    %5 = vector.load %arg9[%c0_5, %c128] : memref<4x512xf32, #tpu.memory_space<vmem>>, vector<4x256xf32>
    tpu.vector_store %arg9[%c0_5, %c128], %1 {strides = array<i32>} : memref<4x512xf32, #tpu.memory_space<vmem>>, vector<4x256xf32>,
    %6 = tpu.iota {dimensions = array<i32: 1>} : vector<1x256xi32>
    %c16_i32 = arith.constant 16 : i32
    %c0_i32 = arith.constant 0 : i32
    %7 = arith.cmpi eq, %c16_i32, %c0_i32 : i32
    %c1_i32 = arith.constant 1 : i32
    %8 = arith.select %7, %c1_i32, %c16_i32 : i32
    %9 = vector.broadcast %8 : i32 to vector<1x256xi32>
    %10 = arith.remsi %6, %9 : vector<1x256xi32>
    %c0_i32_6 = arith.constant 0 : i32
    %11 = vector.broadcast %c0_i32_6 : i32 to vector<1x256xi32>
    %12 = arith.cmpi ne, %10, %11 : vector<1x256xi32>
    %c0_i32_7 = arith.constant 0 : i32
    %13 = vector.broadcast %c0_i32_7 : i32 to vector<1x256xi32>
    %14 = arith.cmpi slt, %10, %13 : vector<1x256xi32>
    %c0_i32_8 = arith.constant 0 : i32
    %15 = arith.cmpi slt, %8, %c0_i32_8 : i32
    %16 = vector.broadcast %15 : i1 to vector<1x256xi1>
    %17 = vector.broadcast %16 : vector<1x256xi1> to vector<1x256xi1>
    %18 = arith.xori %14, %17 : vector<1x256xi1>
    %19 = arith.andi %18, %12 : vector<1x256xi1>
    %20 = vector.broadcast %8 : i32 to vector<1x256xi32>
    %21 = arith.addi %10, %20 : vector<1x256xi32>
    %22 = arith.select %19, %21, %10 : vector<1x256xi1>, vector<1x256xi32>
    %c1_i32_9 = arith.constant 1 : i32
    %23 = vector.broadcast %c1_i32_9 : i32 to vector<1x256xi32>
    %24 = arith.cmpi sge, %22, %23 : vector<1x256xi32>
    %c14_i32 = arith.constant 14 : i32
    %25 = vector.broadcast %c14_i32 : i32 to vector<1x256xi32>
    %26 = arith.cmpi sle, %22, %25 : vector<1x256xi32>
    %c0_10 = arith.constant 0 : index
    %c111 = arith.constant 111 : index
    %27 = vector.load %arg9[%c0_10, %c111] : memref<4x512xf32, #tpu.memory_space<vmem>>, vector<4x256xf32>
    %cst_11 = arith.constant 0.000000e+00 : f32
    %28 = vector.broadcast %cst_11 : f32 to vector<4x256xf32>
    %29 = vector.shape_cast %24 : vector<1x256xi1> to vector<1x256xi1>
    %30 = vector.broadcast %29 : vector<1x256xi1> to vector<4x256xi1>
    %31 = arith.select %30, %27, %28 : vector<4x256xi1>, vector<4x256xf32>
    %c0_12 = arith.constant 0 : index
    %c0_13 = arith.constant 0 : index
    %c0_14 = arith.constant 0 : index
    %32 = vector.load %arg2[%c0_12, %c0_13, %c0_14] : memref<9x64x4xf32, #tpu.memory_space<vmem>>, vector<1x64x4xf32>
    %33 = vector.shape_cast %32 : vector<1x64x4xf32> to vector<64x4xf32>
    %cst_15 = arith.constant dense<0.000000e+00> : vector<64x256xf32>
    %34 = tpu.matmul %33, %31, %cst_15 {dimension_numbers = #tpu.dot_dimension_numbers<[1], [0], [0], [1], [0, 0, 1, 1], [], []>} : vector<64x4xf32>, vector<4x256xf32>, vector<64x256xf32> -> vector<64x256xf32>
    %c0_16 = arith.constant 0 : index
    %c0_17 = arith.constant 0 : index
    %35 = vector.load %arg10[%c0_16, %c0_17] : memref<64x256xf32, #tpu.memory_space<vmem>>, vector<64x256xf32>
    tpu.vector_store %arg10[%c0_16, %c0_17], %34 {strides = array<i32>} : memref<64x256xf32, #tpu.memory_space<vmem>>, vector<64x256xf32>,
    %c0_18 = arith.constant 0 : index
    %c112 = arith.constant 112 : index
    %36 = vector.load %arg9[%c0_18, %c112] : memref<4x512xf32, #tpu.memory_space<vmem>>, vector<4x256xf32>
    %c1 = arith.constant 1 : index
    %c0_19 = arith.constant 0 : index
    %c0_20 = arith.constant 0 : index
    %37 = vector.load %arg2[%c1, %c0_19, %c0_20] : memref<9x64x4xf32, #tpu.memory_space<vmem>>, vector<1x64x4xf32>
    %38 = vector.shape_cast %37 : vector<1x64x4xf32> to vector<64x4xf32>
    %cst_21 = arith.constant dense<0.000000e+00> : vector<64x256xf32>
    %39 = tpu.matmul %38, %36, %cst_21 {dimension_numbers = #tpu.dot_dimension_numbers<[1], [0], [0], [1], [0, 0, 1, 1], [], []>} : vector<64x4xf32>, vector<4x256xf32>, vector<64x256xf32> -> vector<64x256xf32>
    %c0_22 = arith.constant 0 : index
    %c0_23 = arith.constant 0 : index
    %40 = vector.load %arg10[%c0_22, %c0_23] : memref<64x256xf32, #tpu.memory_space<vmem>>, vector<64x256xf32>
    %41 = arith.addf %40, %39 : vector<64x256xf32>
    %c0_24 = arith.constant 0 : index
    %c0_25 = arith.constant 0 : index
    %42 = vector.load %arg10[%c0_24, %c0_25] : memref<64x256xf32, #tpu.memory_space<vmem>>, vector<64x256xf32>
    tpu.vector_store %arg10[%c0_24, %c0_25], %41 {strides = array<i32>} : memref<64x256xf32, #tpu.memory_space<vmem>>, vector<64x256xf32>,
    %c0_26 = arith.constant 0 : index
    %c113 = arith.constant 113 : index
    %43 = vector.load %arg9[%c0_26, %c113] : memref<4x512xf32, #tpu.memory_space<vmem>>, vector<4x256xf32>
    %cst_27 = arith.constant 0.000000e+00 : f32
    %44 = vector.broadcast %cst_27 : f32 to vector<4x256xf32>
    %45 = vector.shape_cast %26 : vector<1x256xi1> to vector<1x256xi1>
    %46 = vector.broadcast %45 : vector<1x256xi1> to vector<4x256xi1>
    %47 = arith.select %46, %43, %44 : vector<4x256xi1>, vector<4x256xf32>
    %c2 = arith.constant 2 : index
    %c0_28 = arith.constant 0 : index
    %c0_29 = arith.constant 0 : index
    %48 = vector.load %arg2[%c2, %c0_28, %c0_29] : memref<9x64x4xf32, #tpu.memory_space<vmem>>, vector<1x64x4xf32>
    %49 = vector.shape_cast %48 : vector<1x64x4xf32> to vector<64x4xf32>
    %cst_30 = arith.constant dense<0.000000e+00> : vector<64x256xf32>
    %50 = tpu.matmul %49, %47, %cst_30 {dimension_numbers = #tpu.dot_dimension_numbers<[1], [0], [0], [1], [0, 0, 1, 1], [], []>} : vector<64x4xf32>, vector<4x256xf32>, vector<64x256xf32> -> vector<64x256xf32>
    %c0_31 = arith.constant 0 : index
    %c0_32 = arith.constant 0 : index
    %51 = vector.load %arg10[%c0_31, %c0_32] : memref<64x256xf32, #tpu.memory_space<vmem>>, vector<64x256xf32>
    %52 = arith.addf %51, %50 : vector<64x256xf32>
    %c0_33 = arith.constant 0 : index
    %c0_34 = arith.constant 0 : index
    %53 = vector.load %arg10[%c0_33, %c0_34] : memref<64x256xf32, #tpu.memory_space<vmem>>, vector<64x256xf32>
    tpu.vector_store %arg10[%c0_33, %c0_34], %52 {strides = array<i32>} : memref<64x256xf32, #tpu.memory_space<vmem>>, vector<64x256xf32>,
    %c0_35 = arith.constant 0 : index
    %c127 = arith.constant 127 : index
    %54 = vector.load %arg9[%c0_35, %c127] : memref<4x512xf32, #tpu.memory_space<vmem>>, vector<4x256xf32>
    %cst_36 = arith.constant 0.000000e+00 : f32
    %55 = vector.broadcast %cst_36 : f32 to vector<4x256xf32>
    %56 = vector.shape_cast %24 : vector<1x256xi1> to vector<1x256xi1>
    %57 = vector.broadcast %56 : vector<1x256xi1> to vector<4x256xi1>
    %58 = arith.select %57, %54, %55 : vector<4x256xi1>, vector<4x256xf32>
    %c3 = arith.constant 3 : index
    %c0_37 = arith.constant 0 : index
    %c0_38 = arith.constant 0 : index
    %59 = vector.load %arg2[%c3, %c0_37, %c0_38] : memref<9x64x4xf32, #tpu.memory_space<vmem>>, vector<1x64x4xf32>
    %60 = vector.shape_cast %59 : vector<1x64x4xf32> to vector<64x4xf32>
    %cst_39 = arith.constant dense<0.000000e+00> : vector<64x256xf32>
    %61 = tpu.matmul %60, %58, %cst_39 {dimension_numbers = #tpu.dot_dimension_numbers<[1], [0], [0], [1], [0, 0, 1, 1], [], []>} : vector<64x4xf32>, vector<4x256xf32>, vector<64x256xf32> -> vector<64x256xf32>
    %c0_40 = arith.constant 0 : index
    %c0_41 = arith.constant 0 : index
    %62 = vector.load %arg10[%c0_40, %c0_41] : memref<64x256xf32, #tpu.memory_space<vmem>>, vector<64x256xf32>
    %63 = arith.addf %62, %61 : vector<64x256xf32>
    %c0_42 = arith.constant 0 : index
    %c0_43 = arith.constant 0 : index
    %64 = vector.load %arg10[%c0_42, %c0_43] : memref<64x256xf32, #tpu.memory_space<vmem>>, vector<64x256xf32>
    tpu.vector_store %arg10[%c0_42, %c0_43], %63 {strides = array<i32>} : memref<64x256xf32, #tpu.memory_space<vmem>>, vector<64x256xf32>,
    %c0_44 = arith.constant 0 : index
    %c128_45 = arith.constant 128 : index
    %65 = vector.load %arg9[%c0_44, %c128_45] : memref<4x512xf32, #tpu.memory_space<vmem>>, vector<4x256xf32>
    %c4 = arith.constant 4 : index
    %c0_46 = arith.constant 0 : index
    %c0_47 = arith.constant 0 : index
    %66 = vector.load %arg2[%c4, %c0_46, %c0_47] : memref<9x64x4xf32, #tpu.memory_space<vmem>>, vector<1x64x4xf32>
    %67 = vector.shape_cast %66 : vector<1x64x4xf32> to vector<64x4xf32>
    %cst_48 = arith.constant dense<0.000000e+00> : vector<64x256xf32>
    %68 = tpu.matmul %67, %65, %cst_48 {dimension_numbers = #tpu.dot_dimension_numbers<[1], [0], [0], [1], [0, 0, 1, 1], [], []>} : vector<64x4xf32>, vector<4x256xf32>, vector<64x256xf32> -> vector<64x256xf32>
    %c0_49 = arith.constant 0 : index
    %c0_50 = arith.constant 0 : index
    %69 = vector.load %arg10[%c0_49, %c0_50] : memref<64x256xf32, #tpu.memory_space<vmem>>, vector<64x256xf32>
    %70 = arith.addf %69, %68 : vector<64x256xf32>
    %c0_51 = arith.constant 0 : index
    %c0_52 = arith.constant 0 : index
    %71 = vector.load %arg10[%c0_51, %c0_52] : memref<64x256xf32, #tpu.memory_space<vmem>>, vector<64x256xf32>
    tpu.vector_store %arg10[%c0_51, %c0_52], %70 {strides = array<i32>} : memref<64x256xf32, #tpu.memory_space<vmem>>, vector<64x256xf32>,
    %c0_53 = arith.constant 0 : index
    %c129 = arith.constant 129 : index
    %72 = vector.load %arg9[%c0_53, %c129] : memref<4x512xf32, #tpu.memory_space<vmem>>, vector<4x256xf32>
    %cst_54 = arith.constant 0.000000e+00 : f32
    %73 = vector.broadcast %cst_54 : f32 to vector<4x256xf32>
    %74 = vector.shape_cast %26 : vector<1x256xi1> to vector<1x256xi1>
    %75 = vector.broadcast %74 : vector<1x256xi1> to vector<4x256xi1>
    %76 = arith.select %75, %72, %73 : vector<4x256xi1>, vector<4x256xf32>
    %c5 = arith.constant 5 : index
    %c0_55 = arith.constant 0 : index
    %c0_56 = arith.constant 0 : index
    %77 = vector.load %arg2[%c5, %c0_55, %c0_56] : memref<9x64x4xf32, #tpu.memory_space<vmem>>, vector<1x64x4xf32>
    %78 = vector.shape_cast %77 : vector<1x64x4xf32> to vector<64x4xf32>
    %cst_57 = arith.constant dense<0.000000e+00> : vector<64x256xf32>
    %79 = tpu.matmul %78, %76, %cst_57 {dimension_numbers = #tpu.dot_dimension_numbers<[1], [0], [0], [1], [0, 0, 1, 1], [], []>} : vector<64x4xf32>, vector<4x256xf32>, vector<64x256xf32> -> vector<64x256xf32>
    %c0_58 = arith.constant 0 : index
    %c0_59 = arith.constant 0 : index
    %80 = vector.load %arg10[%c0_58, %c0_59] : memref<64x256xf32, #tpu.memory_space<vmem>>, vector<64x256xf32>
    %81 = arith.addf %80, %79 : vector<64x256xf32>
    %c0_60 = arith.constant 0 : index
    %c0_61 = arith.constant 0 : index
    %82 = vector.load %arg10[%c0_60, %c0_61] : memref<64x256xf32, #tpu.memory_space<vmem>>, vector<64x256xf32>
    tpu.vector_store %arg10[%c0_60, %c0_61], %81 {strides = array<i32>} : memref<64x256xf32, #tpu.memory_space<vmem>>, vector<64x256xf32>,
    %c0_62 = arith.constant 0 : index
    %c143 = arith.constant 143 : index
    %83 = vector.load %arg9[%c0_62, %c143] : memref<4x512xf32, #tpu.memory_space<vmem>>, vector<4x256xf32>
    %cst_63 = arith.constant 0.000000e+00 : f32
    %84 = vector.broadcast %cst_63 : f32 to vector<4x256xf32>
    %85 = vector.shape_cast %24 : vector<1x256xi1> to vector<1x256xi1>
    %86 = vector.broadcast %85 : vector<1x256xi1> to vector<4x256xi1>
    %87 = arith.select %86, %83, %84 : vector<4x256xi1>, vector<4x256xf32>
    %c6 = arith.constant 6 : index
    %c0_64 = arith.constant 0 : index
    %c0_65 = arith.constant 0 : index
    %88 = vector.load %arg2[%c6, %c0_64, %c0_65] : memref<9x64x4xf32, #tpu.memory_space<vmem>>, vector<1x64x4xf32>
    %89 = vector.shape_cast %88 : vector<1x64x4xf32> to vector<64x4xf32>
    %cst_66 = arith.constant dense<0.000000e+00> : vector<64x256xf32>
    %90 = tpu.matmul %89, %87, %cst_66 {dimension_numbers = #tpu.dot_dimension_numbers<[1], [0], [0], [1], [0, 0, 1, 1], [], []>} : vector<64x4xf32>, vector<4x256xf32>, vector<64x256xf32> -> vector<64x256xf32>
    %c0_67 = arith.constant 0 : index
    %c0_68 = arith.constant 0 : index
    %91 = vector.load %arg10[%c0_67, %c0_68] : memref<64x256xf32, #tpu.memory_space<vmem>>, vector<64x256xf32>
    %92 = arith.addf %91, %90 : vector<64x256xf32>
    %c0_69 = arith.constant 0 : index
    %c0_70 = arith.constant 0 : index
    %93 = vector.load %arg10[%c0_69, %c0_70] : memref<64x256xf32, #tpu.memory_space<vmem>>, vector<64x256xf32>
    tpu.vector_store %arg10[%c0_69, %c0_70], %92 {strides = array<i32>} : memref<64x256xf32, #tpu.memory_space<vmem>>, vector<64x256xf32>,
    %c0_71 = arith.constant 0 : index
    %c144 = arith.constant 144 : index
    %94 = vector.load %arg9[%c0_71, %c144] : memref<4x512xf32, #tpu.memory_space<vmem>>, vector<4x256xf32>
    %c7 = arith.constant 7 : index
    %c0_72 = arith.constant 0 : index
    %c0_73 = arith.constant 0 : index
    %95 = vector.load %arg2[%c7, %c0_72, %c0_73] : memref<9x64x4xf32, #tpu.memory_space<vmem>>, vector<1x64x4xf32>
    %96 = vector.shape_cast %95 : vector<1x64x4xf32> to vector<64x4xf32>
    %cst_74 = arith.constant dense<0.000000e+00> : vector<64x256xf32>
    %97 = tpu.matmul %96, %94, %cst_74 {dimension_numbers = #tpu.dot_dimension_numbers<[1], [0], [0], [1], [0, 0, 1, 1], [], []>} : vector<64x4xf32>, vector<4x256xf32>, vector<64x256xf32> -> vector<64x256xf32>
    %c0_75 = arith.constant 0 : index
    %c0_76 = arith.constant 0 : index
    %98 = vector.load %arg10[%c0_75, %c0_76] : memref<64x256xf32, #tpu.memory_space<vmem>>, vector<64x256xf32>
    %99 = arith.addf %98, %97 : vector<64x256xf32>
    %c0_77 = arith.constant 0 : index
    %c0_78 = arith.constant 0 : index
    %100 = vector.load %arg10[%c0_77, %c0_78] : memref<64x256xf32, #tpu.memory_space<vmem>>, vector<64x256xf32>
    tpu.vector_store %arg10[%c0_77, %c0_78], %99 {strides = array<i32>} : memref<64x256xf32, #tpu.memory_space<vmem>>, vector<64x256xf32>,
    %c0_79 = arith.constant 0 : index
    %c145 = arith.constant 145 : index
    %101 = vector.load %arg9[%c0_79, %c145] : memref<4x512xf32, #tpu.memory_space<vmem>>, vector<4x256xf32>
    %cst_80 = arith.constant 0.000000e+00 : f32
    %102 = vector.broadcast %cst_80 : f32 to vector<4x256xf32>
    %103 = vector.shape_cast %26 : vector<1x256xi1> to vector<1x256xi1>
    %104 = vector.broadcast %103 : vector<1x256xi1> to vector<4x256xi1>
    %105 = arith.select %104, %101, %102 : vector<4x256xi1>, vector<4x256xf32>
    %c8 = arith.constant 8 : index
    %c0_81 = arith.constant 0 : index
    %c0_82 = arith.constant 0 : index
    %106 = vector.load %arg2[%c8, %c0_81, %c0_82] : memref<9x64x4xf32, #tpu.memory_space<vmem>>, vector<1x64x4xf32>
    %107 = vector.shape_cast %106 : vector<1x64x4xf32> to vector<64x4xf32>
    %cst_83 = arith.constant dense<0.000000e+00> : vector<64x256xf32>
    %108 = tpu.matmul %107, %105, %cst_83 {dimension_numbers = #tpu.dot_dimension_numbers<[1], [0], [0], [1], [0, 0, 1, 1], [], []>} : vector<64x4xf32>, vector<4x256xf32>, vector<64x256xf32> -> vector<64x256xf32>
    %c0_84 = arith.constant 0 : index
    %c0_85 = arith.constant 0 : index
    %109 = vector.load %arg10[%c0_84, %c0_85] : memref<64x256xf32, #tpu.memory_space<vmem>>, vector<64x256xf32>
    %110 = arith.addf %109, %108 : vector<64x256xf32>
    %c0_86 = arith.constant 0 : index
    %c0_87 = arith.constant 0 : index
    %111 = vector.load %arg10[%c0_86, %c0_87] : memref<64x256xf32, #tpu.memory_space<vmem>>, vector<64x256xf32>
    tpu.vector_store %arg10[%c0_86, %c0_87], %110 {strides = array<i32>} : memref<64x256xf32, #tpu.memory_space<vmem>>, vector<64x256xf32>,
    %c0_88 = arith.constant 0 : index
    %c0_89 = arith.constant 0 : index
    %112 = vector.load %arg10[%c0_88, %c0_89] : memref<64x256xf32, #tpu.memory_space<vmem>>, vector<64x256xf32>
    %c0_90 = arith.constant 0 : index
    %c0_91 = arith.constant 0 : index
    %113 = vector.load %arg3[%c0_90, %c0_91] : memref<64x1xf32, #tpu.memory_space<vmem>>, vector<64x1xf32>
    %114 = vector.broadcast %113 : vector<64x1xf32> to vector<64x256xf32>
    %115 = arith.addf %112, %114 : vector<64x256xf32>
    %cst_92 = arith.constant 0.000000e+00 : f32
    %116 = vector.broadcast %cst_92 : f32 to vector<64x256xf32>
    %117 = arith.maximumf %115, %116 : vector<64x256xf32>
    %c0_93 = arith.constant 0 : index
    %c0_94 = arith.constant 0 : index
    %118 = vector.load %arg11[%c0_93, %c0_94] : memref<64x256xf32, #tpu.memory_space<vmem>>, vector<64x256xf32>
    tpu.vector_store %arg11[%c0_93, %c0_94], %117 {strides = array<i32>} : memref<64x256xf32, #tpu.memory_space<vmem>>, vector<64x256xf32>,
    %c0_95 = arith.constant 0 : index
    %c0_96 = arith.constant 0 : index
    %119 = vector.load %arg4[%c0_95, %c0_96] : memref<5x64xf32, #tpu.memory_space<vmem>>, vector<5x64xf32>
    %c0_97 = arith.constant 0 : index
    %c0_98 = arith.constant 0 : index
    %120 = vector.load %arg11[%c0_97, %c0_98] : memref<64x256xf32, #tpu.memory_space<vmem>>, vector<64x256xf32>
    %cst_99 = arith.constant dense<0.000000e+00> : vector<5x256xf32>
    %121 = tpu.matmul %119, %120, %cst_99 {dimension_numbers = #tpu.dot_dimension_numbers<[1], [0], [0], [1], [0, 0, 1, 1], [], []>} : vector<5x64xf32>, vector<64x256xf32>, vector<5x256xf32> -> vector<5x256xf32>
    %c0_100 = arith.constant 0 : index
    %c0_101 = arith.constant 0 : index
    %122 = vector.load %arg5[%c0_100, %c0_101] : memref<5x1xf32, #tpu.memory_space<vmem>>, vector<5x1xf32>
    %123 = vector.broadcast %122 : vector<5x1xf32> to vector<5x256xf32>
    %124 = arith.addf %121, %123 : vector<5x256xf32>
    %c0_102 = arith.constant 0 : index
    %c0_103 = arith.constant 0 : index
    %c0_104 = arith.constant 0 : index
    %125 = vector.load %arg8[%c0_102, %c0_103, %c0_104] : memref<1x7x256xf32, #tpu.memory_space<vmem>>, vector<1x5x256xf32>
    %126 = vector.shape_cast %125 : vector<1x5x256xf32> to vector<5x256xf32>
    %127 = vector.shape_cast %124 : vector<5x256xf32> to vector<1x5x256xf32>
    tpu.vector_store %arg8[%c0_102, %c0_103, %c0_104], %127 {strides = array<i32>} : memref<1x7x256xf32, #tpu.memory_space<vmem>>, vector<1x5x256xf32>,
    %c0_105 = arith.constant 0 : index
    %c0_106 = arith.constant 0 : index
    %128 = vector.load %arg6[%c0_105, %c0_106] : memref<2x4xf32, #tpu.memory_space<vmem>>, vector<2x4xf32>
    %cst_107 = arith.constant dense<0.000000e+00> : vector<2x256xf32>
    %129 = tpu.matmul %128, %1, %cst_107 {dimension_numbers = #tpu.dot_dimension_numbers<[1], [0], [0], [1], [0, 0, 1, 1], [], []>} : vector<2x4xf32>, vector<4x256xf32>, vector<2x256xf32> -> vector<2x256xf32>
    %c0_108 = arith.constant 0 : index
    %c0_109 = arith.constant 0 : index
    %130 = vector.load %arg7[%c0_108, %c0_109] : memref<2x1xf32, #tpu.memory_space<vmem>>, vector<2x1xf32>
    %131 = vector.broadcast %130 : vector<2x1xf32> to vector<2x256xf32>
    %132 = arith.addf %129, %131 : vector<2x256xf32>
    %c0_110 = arith.constant 0 : index
    %c5_111 = arith.constant 5 : index
    %c0_112 = arith.constant 0 : index
    %133 = vector.load %arg8[%c0_110, %c5_111, %c0_112] : memref<1x7x256xf32, #tpu.memory_space<vmem>>, vector<1x2x256xf32>
    %134 = vector.shape_cast %133 : vector<1x2x256xf32> to vector<2x256xf32>
    %135 = vector.shape_cast %132 : vector<2x256xf32> to vector<1x2x256xf32>
    tpu.vector_store %arg8[%c0_110, %c5_111, %c0_112], %135 {strides = array<i32>} : memref<1x7x256xf32, #tpu.memory_space<vmem>>, vector<1x2x256xf32>,
    return
  }
  func.func @transform_0(%arg0: i32) -> (i32, i32, i32) {
    %c0_i32 = arith.constant 0 : i32
    %c0_i32_0 = arith.constant 0 : i32
    %c0_i32_1 = arith.constant 0 : i32
    return %arg0, %c0_i32, %c0_i32_0 : i32, i32, i32
  }
  func.func @transform_1(%arg0: i32) -> (i32, i32, i32) {
    %c0_i32 = arith.constant 0 : i32
    %c0_i32_0 = arith.constant 0 : i32
    %c0_i32_1 = arith.constant 0 : i32
    %c0_i32_2 = arith.constant 0 : i32
    return %c0_i32, %c0_i32_0, %c0_i32_1 : i32, i32, i32
  }
  func.func @transform_2(%arg0: i32) -> (i32, i32) {
    %c0_i32 = arith.constant 0 : i32
    %c0_i32_0 = arith.constant 0 : i32
    %c0_i32_1 = arith.constant 0 : i32
    return %c0_i32, %c0_i32_0 : i32, i32
  }
  func.func @transform_3(%arg0: i32) -> (i32, i32) {
    %c0_i32 = arith.constant 0 : i32
    %c0_i32_0 = arith.constant 0 : i32
    %c0_i32_1 = arith.constant 0 : i32
    return %c0_i32, %c0_i32_0 : i32, i32
  }
  func.func @transform_4(%arg0: i32) -> (i32, i32) {
    %c0_i32 = arith.constant 0 : i32
    %c0_i32_0 = arith.constant 0 : i32
    %c0_i32_1 = arith.constant 0 : i32
    return %c0_i32, %c0_i32_0 : i32, i32
  }
  func.func @transform_5(%arg0: i32) -> (i32, i32) {
    %c0_i32 = arith.constant 0 : i32
    %c0_i32_0 = arith.constant 0 : i32
    %c0_i32_1 = arith.constant 0 : i32
    return %c0_i32, %c0_i32_0 : i32, i32
  }
  func.func @transform_6(%arg0: i32) -> (i32, i32) {
    %c0_i32 = arith.constant 0 : i32
    %c0_i32_0 = arith.constant 0 : i32
    %c0_i32_1 = arith.constant 0 : i32
    return %c0_i32, %c0_i32_0 : i32, i32
  }
  func.func @transform_7(%arg0: i32) -> (i32, i32, i32) {
    %c0_i32 = arith.constant 0 : i32
    %c0_i32_0 = arith.constant 0 : i32
    %c0_i32_1 = arith.constant 0 : i32
    return %arg0, %c0_i32, %c0_i32_0 : i32, i32, i32
  }
}

</mosaic_0001>

<llo_original>
// kernel: tpu_custom_call.1
$region0: #{tpu_custom_call.1}
  #allocation0 [shape = 'u32[]', space=smem, size = 0x4, offset = 0x4, fixed_abs, tag = 'smem constant byte address 0x4 - core index']
  #allocation1 [shape = 'u32[144,128]{1,0:T(1,128)}', space=vmem, size = 0x12000, scoped, tag = 'internal scratch']
  #allocation2 [shape = 'f32[4,512]{1,0:T(4,128)}', space=vmem, size = 0x2000, scoped, tag = 'scratch operand']
  #allocation3 [shape = 'f32[64,256]{1,0:T(8,128)}', space=vmem, size = 0x10000, scoped, tag = 'scratch operand']
  #allocation4 [shape = 'f32[64,256]{1,0:T(8,128)}', space=vmem, size = 0x10000, scoped, tag = 'scratch operand']
  %s0 = inlined_call_operand.vmem [shape: f32[2,4,256], index: 0, kind: input, shape index: {}]
  %s1 = inlined_call_operand.vmem [shape: f32[9,64,4], index: 1, kind: input, shape index: {}]
  %s2 = inlined_call_operand.vmem [shape: f32[64,1], index: 2, kind: input, shape index: {}]
  %s3 = inlined_call_operand.vmem [shape: f32[5,64], index: 3, kind: input, shape index: {}]
  %s4 = inlined_call_operand.vmem [shape: f32[5,1], index: 4, kind: input, shape index: {}]
  %s5 = inlined_call_operand.vmem [shape: f32[2,4], index: 5, kind: input, shape index: {}]
  %s6 = inlined_call_operand.vmem [shape: f32[2,1], index: 6, kind: input, shape index: {}]
  %s7 = inlined_call_operand.vmem [shape: f32[2,7,256], index: 7, kind: output, shape index: {}]
  %s8 = sld [smem:[#allocation0]]
  $region61: #{tpu_custom_call.1} parent=0
    _
  %s10 = ssub.s32 1, %s8
  %s11 = scalar_select 0, %s10, %s8
  loop: start=0, step=1, limit=4
  $region2: #{tpu_custom_call.1} parent=0 // loop_pre_header
    _
  $region3: #{tpu_custom_call.1} parent=0 // loop_header
    %s13 = sphi 0, %s17
    %p14 = scmp.ge.s32.totalorder %s13, 4
    %s23 = sphi 0, %s25
    %s26 = sphi 0, %s23
    %s27 = sphi 0, %s26
    %s43 = sphi 0, %s27
    %s47 = sphi 0, %s47
    %s49 = sphi 0, %s47
    %s50 = sphi 0, %s49
    %s64 = sphi 0, %s50
    %s68 = sphi 0, %s68
    %s70 = sphi 0, %s68
    %s71 = sphi 0, %s70
    %s85 = sphi 0, %s71
    %s89 = sphi 0, %s89
    %s91 = sphi 0, %s89
    %s92 = sphi 0, %s91
    %s106 = sphi 0, %s92
    %s110 = sphi 0, %s110
    %s112 = sphi 0, %s110
    %s113 = sphi 0, %s112
    %s127 = sphi 0, %s113
    %s131 = sphi 0, %s131
    %s133 = sphi 0, %s131
    %s134 = sphi 0, %s133
    %s148 = sphi 0, %s134
    %s152 = sphi 0, %s152
    %s154 = sphi 0, %s152
    %s155 = sphi 0, %s154
    %s169 = sphi 0, %s155
    %s175 = sphi 0, %s177
    %s178 = sphi 0, %s175
    %s179 = sphi 0, %s178
    %s195 = sphi 0, %s179
  $region4: #{tpu_custom_call.1} parent=0 // loop_header_branch
    %16 = sbr.rel (%p14) target = $region8
  $region5: #{tpu_custom_call.1} parent=0 // loop_body
    %s18 = ssub.s32 %s13, 1
    %s19 = ssub.s32 %s13, 2
    %s20 = sadd.s32 %s13, 1
    %s21 = ssub.s32 %s13, %s20
    %p22 = scmp.eq.s32.totalorder %s21, 0
    %s24 = sadd.s32 %s23, 1
    %s25 = scalar_select %p22, %s23, %s24
    %p28 = pneg %p22
    %p29 = scmp.eq.s32.totalorder %s13, 1
    %p30 = por %p28, %p29
    %p31 = scmp.ne.s32.totalorder %s23, %s26
    %p32 = scmp.eq.s32.totalorder %s13, 0
    %p33 = por %p31, %p32
    %p34 = scmp.ne.s32.totalorder %s23, %s26
    %p35 = scmp.eq.s32.totalorder %s18, 1
    %p36 = por %p34, %p35
    %p37 = scmp.ne.s32.totalorder %s26, %s27
    %p38 = scmp.eq.s32.totalorder %s18, 0
    %p39 = por %p37, %p38
    %p40 = scmp.ne.s32.totalorder %s26, %s27
    %p41 = scmp.eq.s32.totalorder %s19, 1
    %p42 = por %p40, %p41
    %p44 = scmp.ne.s32.totalorder %s27, %s43
    %p45 = scmp.eq.s32.totalorder %s19, 0
    %p46 = por %p44, %p45
    %s48 = sadd.s32 %s47, 1
    %p51 = scmp.eq.s32.totalorder %s13, 1
    %p52 = scmp.ne.s32.totalorder %s47, %s49
    %p53 = scmp.eq.s32.totalorder %s13, 0
    %p54 = por %p52, %p53
    %p55 = scmp.ne.s32.totalorder %s47, %s49
    %p56 = scmp.eq.s32.totalorder %s18, 1
    %p57 = por %p55, %p56
    %p58 = scmp.ne.s32.totalorder %s49, %s50
    %p59 = scmp.eq.s32.totalorder %s18, 0
    %p60 = por %p58, %p59
    %p61 = scmp.ne.s32.totalorder %s49, %s50
    %p62 = scmp.eq.s32.totalorder %s19, 1
    %p63 = por %p61, %p62
    %p65 = scmp.ne.s32.totalorder %s50, %s64
    %p66 = scmp.eq.s32.totalorder %s19, 0
    %p67 = por %p65, %p66
    %s69 = sadd.s32 %s68, 1
    %p72 = scmp.eq.s32.totalorder %s13, 1
    %p73 = scmp.ne.s32.totalorder %s68, %s70
    %p74 = scmp.eq.s32.totalorder %s13, 0
    %p75 = por %p73, %p74
    %p76 = scmp.ne.s32.totalorder %s68, %s70
    %p77 = scmp.eq.s32.totalorder %s18, 1
    %p78 = por %p76, %p77
    %p79 = scmp.ne.s32.totalorder %s70, %s71
    %p80 = scmp.eq.s32.totalorder %s18, 0
    %p81 = por %p79, %p80
    %p82 = scmp.ne.s32.totalorder %s70, %s71
    %p83 = scmp.eq.s32.totalorder %s19, 1
    %p84 = por %p82, %p83
    %p86 = scmp.ne.s32.totalorder %s71, %s85
    %p87 = scmp.eq.s32.totalorder %s19, 0
    %p88 = por %p86, %p87
    %s90 = sadd.s32 %s89, 1
    %p93 = scmp.eq.s32.totalorder %s13, 1
    %p94 = scmp.ne.s32.totalorder %s89, %s91
    %p95 = scmp.eq.s32.totalorder %s13, 0
    %p96 = por %p94, %p95
    %p97 = scmp.ne.s32.totalorder %s89, %s91
    %p98 = scmp.eq.s32.totalorder %s18, 1
    %p99 = por %p97, %p98
    %p100 = scmp.ne.s32.totalorder %s91, %s92
    %p101 = scmp.eq.s32.totalorder %s18, 0
    %p102 = por %p100, %p101
    %p103 = scmp.ne.s32.totalorder %s91, %s92
    %p104 = scmp.eq.s32.totalorder %s19, 1
    %p105 = por %p103, %p104
    %p107 = scmp.ne.s32.totalorder %s92, %s106
    %p108 = scmp.eq.s32.totalorder %s19, 0
    %p109 = por %p107, %p108
    %s111 = sadd.s32 %s110, 1
    %p114 = scmp.eq.s32.totalorder %s13, 1
    %p115 = scmp.ne.s32.totalorder %s110, %s112
    %p116 = scmp.eq.s32.totalorder %s13, 0
    %p117 = por %p115, %p116
    %p118 = scmp.ne.s32.totalorder %s110, %s112
    %p119 = scmp.eq.s32.totalorder %s18, 1
    %p120 = por %p118, %p119
    %p121 = scmp.ne.s32.totalorder %s112, %s113
    %p122 = scmp.eq.s32.totalorder %s18, 0
    %p123 = por %p121, %p122
    %p124 = scmp.ne.s32.totalorder %s112, %s113
    %p125 = scmp.eq.s32.totalorder %s19, 1
    %p126 = por %p124, %p125
    %p128 = scmp.ne.s32.totalorder %s113, %s127
    %p129 = scmp.eq.s32.totalorder %s19, 0
    %p130 = por %p128, %p129
    %s132 = sadd.s32 %s131, 1
    %p135 = scmp.eq.s32.totalorder %s13, 1
    %p136 = scmp.ne.s32.totalorder %s131, %s133
    %p137 = scmp.eq.s32.totalorder %s13, 0
    %p138 = por %p136, %p137
    %p139 = scmp.ne.s32.totalorder %s131, %s133
    %p140 = scmp.eq.s32.totalorder %s18, 1
    %p141 = por %p139, %p140
    %p142 = scmp.ne.s32.totalorder %s133, %s134
    %p143 = scmp.eq.s32.totalorder %s18, 0
    %p144 = por %p142, %p143
    %p145 = scmp.ne.s32.totalorder %s133, %s134
    %p146 = scmp.eq.s32.totalorder %s19, 1
    %p147 = por %p145, %p146
    %p149 = scmp.ne.s32.totalorder %s134, %s148
    %p150 = scmp.eq.s32.totalorder %s19, 0
    %p151 = por %p149, %p150
    %s153 = sadd.s32 %s152, 1
    %p156 = scmp.eq.s32.totalorder %s13, 1
    %p157 = scmp.ne.s32.totalorder %s152, %s154
    %p158 = scmp.eq.s32.totalorder %s13, 0
    %p159 = por %p157, %p158
    %p160 = scmp.ne.s32.totalorder %s152, %s154
    %p161 = scmp.eq.s32.totalorder %s18, 1
    %p162 = por %p160, %p161
    %p163 = scmp.ne.s32.totalorder %s154, %s155
    %p164 = scmp.eq.s32.totalorder %s18, 0
    %p165 = por %p163, %p164
    %p166 = scmp.ne.s32.totalorder %s154, %s155
    %p167 = scmp.eq.s32.totalorder %s19, 1
    %p168 = por %p166, %p167
    %p170 = scmp.ne.s32.totalorder %s155, %s169
    %p171 = scmp.eq.s32.totalorder %s19, 0
    %p172 = por %p170, %p171
    %s173 = ssub.s32 %s13, %s20
    %p174 = scmp.eq.s32.totalorder %s173, 0
    %s176 = sadd.s32 %s175, 1
    %s177 = scalar_select %p174, %s175, %s176
    %p180 = pneg %p174
    %p181 = scmp.eq.s32.totalorder %s13, 1
    %p182 = por %p180, %p181
    %p183 = scmp.ne.s32.totalorder %s175, %s178
    %p184 = scmp.eq.s32.totalorder %s13, 0
    %p185 = por %p183, %p184
    %p186 = scmp.ne.s32.totalorder %s175, %s178
    %p187 = scmp.eq.s32.totalorder %s18, 1
    %p188 = por %p186, %p187
    %p189 = scmp.ne.s32.totalorder %s178, %s179
    %p190 = scmp.eq.s32.totalorder %s18, 0
    %p191 = por %p189, %p190
    %p192 = scmp.ne.s32.totalorder %s178, %s179
    %p193 = scmp.eq.s32.totalorder %s19, 1
    %p194 = por %p192, %p193
    %p196 = scmp.ne.s32.totalorder %s179, %s195
    %p197 = scmp.eq.s32.totalorder %s19, 0
    %p198 = por %p196, %p197
    %p199 = scmp.le.s32.totalorder 1, %s13
    %p200 = scmp.lt.s32.totalorder %s13, 3
    %p201 = pnand %p199, %p200
    %p202 = pneg %p201
    // Predicated region
    $region9: #{tpu_custom_call.1} parent=5 // pred_check
      _
    $region10: #{tpu_custom_call.1} parent=5 // pred_check_branch
      %204 = sbr.rel (%p201) target = $region12
    $region11: #{tpu_custom_call.1} parent=5 // pred_region
      %s205 = ssub.s32 %s13, 1
      // Predicated region
      $region13: #{tpu_custom_call.1} parent=11 // pred_check
        %p206 = pneg %p60
      $region14: #{tpu_custom_call.1} parent=11 // pred_check_branch
        %208 = sbr.rel (%p206) target = $region16
      $region15: #{tpu_custom_call.1} parent=11 // pred_region
        _
      $region16: #{tpu_custom_call.1} parent=11 // pred_fallthru
        _
      // Predicated region
      $region17: #{tpu_custom_call.1} parent=11 // pred_check
        %p209 = pneg %p81
      $region18: #{tpu_custom_call.1} parent=11 // pred_check_branch
        %211 = sbr.rel (%p209) target = $region20
      $region19: #{tpu_custom_call.1} parent=11 // pred_region
        _
      $region20: #{tpu_custom_call.1} parent=11 // pred_fallthru
        _
      // Predicated region
      $region21: #{tpu_custom_call.1} parent=11 // pred_check
        %p212 = pneg %p102
      $region22: #{tpu_custom_call.1} parent=11 // pred_check_branch
        %214 = sbr.rel (%p212) target = $region24
      $region23: #{tpu_custom_call.1} parent=11 // pred_region
        _
      $region24: #{tpu_custom_call.1} parent=11 // pred_fallthru
        _
      // Predicated region
      $region25: #{tpu_custom_call.1} parent=11 // pred_check
        %p215 = pneg %p123
      $region26: #{tpu_custom_call.1} parent=11 // pred_check_branch
        %217 = sbr.rel (%p215) target = $region28
      $region27: #{tpu_custom_call.1} parent=11 // pred_region
        _
      $region28: #{tpu_custom_call.1} parent=11 // pred_fallthru
        _
      // Predicated region
      $region29: #{tpu_custom_call.1} parent=11 // pred_check
        %p218 = pneg %p144
      $region30: #{tpu_custom_call.1} parent=11 // pred_check_branch
        %220 = sbr.rel (%p218) target = $region32
      $region31: #{tpu_custom_call.1} parent=11 // pred_region
        _
      $region32: #{tpu_custom_call.1} parent=11 // pred_fallthru
        _
      // Predicated region
      $region33: #{tpu_custom_call.1} parent=11 // pred_check
        %p221 = pneg %p165
      $region34: #{tpu_custom_call.1} parent=11 // pred_check_branch
        %223 = sbr.rel (%p221) target = $region36
      $region35: #{tpu_custom_call.1} parent=11 // pred_region
        _
      $region36: #{tpu_custom_call.1} parent=11 // pred_fallthru
        _
    $region12: #{tpu_custom_call.1} parent=5 // pred_fallthru
      _
    %p224 = scmp.lt.s32.totalorder %s13, 2
    // Predicated region
    $region37: #{tpu_custom_call.1} parent=5 // pred_check
      %p225 = pneg %p224
    $region38: #{tpu_custom_call.1} parent=5 // pred_check_branch
      %227 = sbr.rel (%p225) target = $region40
    $region39: #{tpu_custom_call.1} parent=5 // pred_region
      // Predicated region
      $region41: #{tpu_custom_call.1} parent=39 // pred_check
        %p228 = pneg %p33
      $region42: #{tpu_custom_call.1} parent=39 // pred_check_branch
        %230 = sbr.rel (%p228) target = $region44
      $region43: #{tpu_custom_call.1} parent=39 // pred_region
        %p231 = scmp.lt.s32.totalorder %s13, 1
        %s232 = scalar_select %p231, %s13, 1
        %s233 = smul.addr %s232, 2
        %s234 = smul.addr %s233, 4
        %s235 = scalar_lea.vmem %s0, %s234
      $region44: #{tpu_custom_call.1} parent=39 // pred_fallthru
        _
    $region40: #{tpu_custom_call.1} parent=5 // pred_fallthru
      _
    %p236 = scmp.le.s32.totalorder 1, %s13
    %p237 = scmp.lt.s32.totalorder %s13, 3
    %p238 = pnand %p236, %p237
    %p239 = pneg %p238
    // Predicated region
    $region45: #{tpu_custom_call.1} parent=5 // pred_check
      _
    $region46: #{tpu_custom_call.1} parent=5 // pred_check_branch
      %241 = sbr.rel (%p238) target = $region48
    $region47: #{tpu_custom_call.1} parent=5 // pred_region
      %s242 = ssub.s32 %s13, 1
      %p243 = scmp.lt.s32.totalorder %s18, 1
      %s244 = scalar_select %p243, %s18, 1
      %s245 = smul.addr %s244, 2
      %s246 = smul.addr %s245, 4
      %s247 = scalar_lea.vmem %s0, %s246
      %p248 = pneg %p39
      %p249 = pneg %p36
      %p250 = pneg %p60
      %p251 = pneg %p57
      %p252 = pneg %p81
      %p253 = pneg %p78
      %p254 = pneg %p102
      %p255 = pneg %p99
      %p256 = pneg %p123
      %p257 = pneg %p120
      %p258 = pneg %p144
      %p259 = pneg %p141
      %p260 = pneg %p165
      %p261 = pneg %p162
      %p262 = pneg %p191
      %p263 = pneg %p188
      %p264 = scmp.lt.s32.totalorder %s18, 1
      %s265 = scalar_select %p264, %s18, 1
      %s266 = smul.addr %s265, 2
      %s267 = smul.addr %s266, 8
      %s268 = scalar_lea.vmem %s7, %s267
      %p269 = scmp.lt.s32.totalorder %s18, 1
      %s270 = scalar_select %p269, %s18, 1
      %s271 = smul.addr %s270, 2
      %s272 = smul.addr %s271, 4
      %s273 = scalar_lea.vmem %s0, %s272
      %p274 = scmp.lt.s32.totalorder %s18, 1
      %s275 = scalar_select %p274, %s18, 1
      %s276 = smul.addr %s275, 2
      %s277 = smul.addr %s276, 8
      %s278 = scalar_lea.vmem %s7, %s277
      %v279 = vld [vmem:[%s273] sm:$0xff]
      %280 = vst [vmem:[#allocation2] sm:$0xf] 0.0
      %281 = vst [vmem:[#allocation2 + $0xc] sm:$0xf] 0.0
      %282 = vst [vmem:[#allocation2 + $0x4] sm:$0xff] %v279
      %v283 = vlaneseq
      %v284 = vand.u32 %v283, 127
      %v285 = vadd.s32 %v284, 128
      %vm286 = vcmp.lt.s32.totalorder %v284, 0
      %v287 = vsub.s32 0, %v284
      %v288 = vsel %vm286, %v287, %v284
      %v289 = vshrl.u32 %v288, 4
      %v290 = vand.u32 %v288, 15
      %v291 = vsub.s32 0, %v290
      %v292 = vsel %vm286, %v291, %v290
      %vm293 = vcmp.lt.s32.totalorder %v285, 0
      %v294 = vsub.s32 0, %v285
      %v295 = vsel %vm293, %v294, %v285
      %v296 = vshrl.u32 %v295, 4
      %v297 = vand.u32 %v295, 15
      %v298 = vsub.s32 0, %v297
      %v299 = vsel %vm293, %v298, %v297
      %vm300 = vcmp.ne.s32.totalorder %v292, 0
      %vm301 = vcmp.ne.s32.totalorder %v299, 0
      %vm302 = vcmp.lt.s32.totalorder %v292, 0
      %vm303 = vcmp.lt.s32.totalorder %v299, 0
      %vm304 = vmand %vm302, %vm300
      %vm305 = vmand %vm303, %vm301
      %v306 = vadd.s32 %v292, 16
      %v307 = vadd.s32 %v299, 16
      %v308 = vsel %vm304, %v306, %v292
      %v309 = vsel %vm305, %v307, %v299
      %vm310 = vcmp.ge.s32.totalorder %v308, 1
      %vm311 = vcmp.ge.s32.totalorder %v309, 1
      %vm312 = vcmp.le.s32.totalorder %v308, 14
      %vm313 = vcmp.le.s32.totalorder %v309, 14
      %v314 = vld [vmem:[#allocation2] sm:$0xff]
      %v315 = vld [vmem:[#allocation2 + $0x8] sm:$0xf]
      %v316 = vsel %vm310, 1, 0
      %v317 = vsel %vm311, 1, 0
      %vm318 = vcmp.eq.s32.totalorder %v316, 1
      %vm319 = vcmp.eq.s32.totalorder %v317, 1
      %v322 = vcombine.high %v314, %v314
      %323 = vrot.lane.b32.xlu0 %v314, 17
      %v324 = vpop.permute.xlu0 %323
      %325 = vrot.lane.b32.xlu0 %v322, 17
      %v326 = vpop.permute.xlu0 %325
      %327 = vrot.lane.b32.xlu0 %v315, 17
      %v328 = vpop.permute.xlu0 %327
      %vm329 = vcmask 138240
      %v330 = vsel %vm329, %v324, %v326
      %v331 = vsel %vm329, %v326, %v328
      %v334 = vsel %vm318, %v330, 0.0
      %v335 = vsel %vm319, %v331, 0.0
      %v336 = vld [vmem:[%s1] sm:$0xff]
      %v337 = vld [vmem:[%s1 + $0x8] sm:$0xff]
      %v338 = vld [vmem:[%s1 + $0x10] sm:$0xff]
      %v339 = vld [vmem:[%s1 + $0x18] sm:$0xff]
      %v340 = vld [vmem:[%s1 + $0x20] sm:$0xff]
      %v341 = vld [vmem:[%s1 + $0x28] sm:$0xff]
      %v342 = vld [vmem:[%s1 + $0x30] sm:$0xff]
      %v343 = vld [vmem:[%s1 + $0x38] sm:$0xff]
      %vm344 = vcmask 31744
      %v346 = vsel %vm344, %v336, 0
      %v349 = vsel %vm344, %v337, 0
      %v352 = vsel %vm344, %v338, 0
      %v355 = vsel %vm344, %v339, 0
      %v358 = vsel %vm344, %v340, 0
      %v361 = vsel %vm344, %v341, 0
      %v364 = vsel %vm344, %v342, 0
      %v367 = vsel %vm344, %v343, 0
      %vm369 = vcmask 1043456
      %v371 = vsel %vm369, %v334, 0
      %v374 = vsel %vm369, %v335, 0
      %376 = vmatprep.subr.mxu0 %v374
      %377 = vmatpush1.msra.mxu0 %v371
      %378 = vmatprep.subr.mxu0 0.0
      %379 = vmatpush1.msra.mxu0 0.0
      %380 = vmatprep.subr.mxu0 0.0
      %381 = vmatpush1.msra.mxu0 0.0
      %382 = vmatprep.subr.mxu0 0.0
      %383 = vmatpush1.msra.mxu0 0.0
      %384 = vmatprep.subr.mxu0 0.0
      %385 = vmatpush1.msra.mxu0 0.0
      %386 = vmatprep.subr.mxu0 0.0
      %387 = vmatpush1.msra.mxu0 0.0
      %388 = vmatprep.subr.mxu0 0.0
      %389 = vmatpush1.msra.mxu0 0.0
      %390 = vmatprep.subr.mxu0 0.0
      %391 = vmatpush1.msra.mxu0 0.0
      %392 = vmatprep.subr.mxu0 0.0
      %393 = vmatpush1.msra.mxu0 0.0
      %394 = vmatprep.subr.mxu0 0.0
      %395 = vmatpush1.msra.mxu0 0.0
      %396 = vmatprep.subr.mxu0 0.0
      %397 = vmatpush1.msra.mxu0 0.0
      %398 = vmatprep.subr.mxu0 0.0
      %399 = vmatpush1.msra.mxu0 0.0
      %400 = vmatprep.subr.mxu0 0.0
      %401 = vmatpush1.msra.mxu0 0.0
      %402 = vmatprep.subr.mxu0 0.0
      %403 = vmatpush1.msra.mxu0 0.0
      %404 = vmatprep.subr.mxu0 0.0
      %405 = vmatpush1.msra.mxu0 0.0
      %406 = vmatprep.subr.mxu0 0.0
      %407 = vmatpush1.msra.mxu0 0.0
      %408 = vmatprep.subr.mxu0 0.0
      %409 = vmatpush1.msra.mxu0 0.0
      %410 = vmatprep.subr.mxu0 0.0
      %411 = vmatpush1.msra.mxu0 0.0
      %412 = vmatprep.subr.mxu0 0.0
      %413 = vmatpush1.msra.mxu0 0.0
      %414 = vmatprep.subr.mxu0 0.0
      %415 = vmatpush1.msra.mxu0 0.0
      %416 = vmatprep.subr.mxu0 0.0
      %417 = vmatpush1.msra.mxu0 0.0
      %418 = vmatprep.subr.mxu0 0.0
      %419 = vmatpush1.msra.mxu0 0.0
      %420 = vmatprep.subr.mxu0 0.0
      %421 = vmatpush1.msra.mxu0 0.0
      %422 = vmatprep.subr.mxu0 0.0
      %423 = vmatpush1.msra.mxu0 0.0
      %424 = vmatprep.subr.mxu0 0.0
      %425 = vmatpush1.msra.mxu0 0.0
      %426 = vmatprep.subr.mxu0 0.0
      %427 = vmatpush1.msra.mxu0 0.0
      %428 = vmatprep.subr.mxu0 0.0
      %429 = vmatpush1.msra.mxu0 0.0
      %430 = vmatprep.subr.mxu0 0.0
      %431 = vmatpush1.msra.mxu0 0.0
      %432 = vmatprep.subr.mxu0 0.0
      %433 = vmatpush1.msra.mxu0 0.0
      %434 = vmatprep.subr.mxu0 0.0
      %435 = vmatpush1.msra.mxu0 0.0
      %436 = vmatprep.subr.mxu0 0.0
      %437 = vmatpush1.msra.mxu0 0.0
      %438 = vmatprep.subr.mxu0 0.0
      %439 = vmatpush1.msra.mxu0 0.0
      %440 = vmatprep.mubr.f32.mxu0 0.0
      %441 = vmatmul.mubr.f32.gmra.mrb[0].mxu0 %v346
      %v442 = vpop.f32.mrb[0].mxu0
      %v443 = vadd.f32 0.0, %v442
      %v444 = vpop.f32.mrb[0].mxu0
      %v445 = vadd.f32 0.0, %v444
      %446 = vmatprep.mubr.f32.mxu0 0.0
      %447 = vmatmul.mubr.f32.gmra.mrb[0].mxu0 %v349
      %v448 = vpop.f32.mrb[0].mxu0
      %v449 = vadd.f32 0.0, %v448
      %v450 = vpop.f32.mrb[0].mxu0
      %v451 = vadd.f32 0.0, %v450
      %452 = vmatprep.mubr.f32.mxu0 0.0
      %453 = vmatmul.mubr.f32.gmra.mrb[0].mxu0 %v352
      %v454 = vpop.f32.mrb[0].mxu0
      %v455 = vadd.f32 0.0, %v454
      %v456 = vpop.f32.mrb[0].mxu0
      %v457 = vadd.f32 0.0, %v456
      %458 = vmatprep.mubr.f32.mxu0 0.0
      %459 = vmatmul.mubr.f32.gmra.mrb[0].mxu0 %v355
      %v460 = vpop.f32.mrb[0].mxu0
      %v461 = vadd.f32 0.0, %v460
      %v462 = vpop.f32.mrb[0].mxu0
      %v463 = vadd.f32 0.0, %v462
      %464 = vmatprep.mubr.f32.mxu0 0.0
      %465 = vmatmul.mubr.f32.gmra.mrb[0].mxu0 %v358
      %v466 = vpop.f32.mrb[0].mxu0
      %v467 = vadd.f32 0.0, %v466
      %v468 = vpop.f32.mrb[0].mxu0
      %v469 = vadd.f32 0.0, %v468
      %470 = vmatprep.mubr.f32.mxu0 0.0
      %471 = vmatmul.mubr.f32.gmra.mrb[0].mxu0 %v361
      %v472 = vpop.f32.mrb[0].mxu0
      %v473 = vadd.f32 0.0, %v472
      %v474 = vpop.f32.mrb[0].mxu0
      %v475 = vadd.f32 0.0, %v474
      %476 = vmatprep.mubr.f32.mxu0 0.0
      %477 = vmatmul.mubr.f32.gmra.mrb[0].mxu0 %v364
      %v478 = vpop.f32.mrb[0].mxu0
      %v479 = vadd.f32 0.0, %v478
      %v480 = vpop.f32.mrb[0].mxu0
      %v481 = vadd.f32 0.0, %v480
      %482 = vmatprep.mubr.f32.mxu0 0.0
      %483 = vmatmul.mubr.f32.gmra.mrb[0].mxu0 %v367
      %v484 = vpop.f32.mrb[0].mxu0
      %v485 = vadd.f32 0.0, %v484
      %v486 = vpop.f32.mrb[0].mxu0
      %v487 = vadd.f32 0.0, %v486
      %488 = vdwg.mxu0
      %489 = vst [vmem:[#allocation3] sm:$0xff] %v443
      %490 = vst [vmem:[#allocation3 + $0x8] sm:$0xff] %v445
      %491 = vst [vmem:[#allocation3 + $0x10] sm:$0xff] %v449
      %492 = vst [vmem:[#allocation3 + $0x18] sm:$0xff] %v451
      %493 = vst [vmem:[#allocation3 + $0x20] sm:$0xff] %v455
      %494 = vst [vmem:[#allocation3 + $0x28] sm:$0xff] %v457
      %495 = vst [vmem:[#allocation3 + $0x30] sm:$0xff] %v461
      %496 = vst [vmem:[#allocation3 + $0x38] sm:$0xff] %v463
      %497 = vst [vmem:[#allocation3 + $0x40] sm:$0xff] %v467
      %498 = vst [vmem:[#allocation3 + $0x48] sm:$0xff] %v469
      %499 = vst [vmem:[#allocation3 + $0x50] sm:$0xff] %v473
      %500 = vst [vmem:[#allocation3 + $0x58] sm:$0xff] %v475
      %501 = vst [vmem:[#allocation3 + $0x60] sm:$0xff] %v479
      %502 = vst [vmem:[#allocation3 + $0x68] sm:$0xff] %v481
      %503 = vst [vmem:[#allocation3 + $0x70] sm:$0xff] %v485
      %504 = vst [vmem:[#allocation3 + $0x78] sm:$0xff] %v487
      %v505 = vld [vmem:[#allocation2] sm:$0xff]
      %v506 = vld [vmem:[#allocation2 + $0x8] sm:$0xf]
      %s507 = scalar_lea.vmem %s1, 64
      %v508 = vld [vmem:[%s507] sm:$0xff]
      %v509 = vld [vmem:[%s507 + $0x8] sm:$0xff]
      %v510 = vld [vmem:[%s507 + $0x10] sm:$0xff]
      %v511 = vld [vmem:[%s507 + $0x18] sm:$0xff]
      %v512 = vld [vmem:[%s507 + $0x20] sm:$0xff]
      %v513 = vld [vmem:[%s507 + $0x28] sm:$0xff]
      %v514 = vld [vmem:[%s507 + $0x30] sm:$0xff]
      %v515 = vld [vmem:[%s507 + $0x38] sm:$0xff]
      %v518 = vcombine.high %v505, %v505
      %519 = vrot.lane.b32.xlu0 %v505, 16
      %v520 = vpop.permute.xlu0 %519
      %521 = vrot.lane.b32.xlu0 %v518, 16
      %v522 = vpop.permute.xlu0 %521
      %523 = vrot.lane.b32.xlu0 %v506, 16
      %v524 = vpop.permute.xlu0 %523
      %vm525 = vcmask 130048
      %v526 = vsel %vm525, %v520, %v522
      %v527 = vsel %vm525, %v522, %v524
      %v529 = vsel %vm344, %v508, 0
      %v532 = vsel %vm344, %v509, 0
      %v535 = vsel %vm344, %v510, 0
      %v538 = vsel %vm344, %v511, 0
      %v541 = vsel %vm344, %v512, 0
      %v544 = vsel %vm344, %v513, 0
      %v547 = vsel %vm344, %v514, 0
      %v550 = vsel %vm344, %v515, 0
      %v552 = vsel %vm369, %v526, 0
      %v554 = vsel %vm369, %v527, 0
      %556 = vmatprep.subr.mxu0 %v554
      %557 = vmatpush1.msra.mxu0 %v552
      %558 = vmatprep.subr.mxu0 0.0
      %559 = vmatpush1.msra.mxu0 0.0
      %560 = vmatprep.subr.mxu0 0.0
      %561 = vmatpush1.msra.mxu0 0.0
      %562 = vmatprep.subr.mxu0 0.0
      %563 = vmatpush1.msra.mxu0 0.0
      %564 = vmatprep.subr.mxu0 0.0
      %565 = vmatpush1.msra.mxu0 0.0
      %566 = vmatprep.subr.mxu0 0.0
      %567 = vmatpush1.msra.mxu0 0.0
      %568 = vmatprep.subr.mxu0 0.0
      %569 = vmatpush1.msra.mxu0 0.0
      %570 = vmatprep.subr.mxu0 0.0
      %571 = vmatpush1.msra.mxu0 0.0
      %572 = vmatprep.subr.mxu0 0.0
      %573 = vmatpush1.msra.mxu0 0.0
      %574 = vmatprep.subr.mxu0 0.0
      %575 = vmatpush1.msra.mxu0 0.0
      %576 = vmatprep.subr.mxu0 0.0
      %577 = vmatpush1.msra.mxu0 0.0
      %578 = vmatprep.subr.mxu0 0.0
      %579 = vmatpush1.msra.mxu0 0.0
      %580 = vmatprep.subr.mxu0 0.0
      %581 = vmatpush1.msra.mxu0 0.0
      %582 = vmatprep.subr.mxu0 0.0
      %583 = vmatpush1.msra.mxu0 0.0
      %584 = vmatprep.subr.mxu0 0.0
      %585 = vmatpush1.msra.mxu0 0.0
      %586 = vmatprep.subr.mxu0 0.0
      %587 = vmatpush1.msra.mxu0 0.0
      %588 = vmatprep.subr.mxu0 0.0
      %589 = vmatpush1.msra.mxu0 0.0
      %590 = vmatprep.subr.mxu0 0.0
      %591 = vmatpush1.msra.mxu0 0.0
      %592 = vmatprep.subr.mxu0 0.0
      %593 = vmatpush1.msra.mxu0 0.0
      %594 = vmatprep.subr.mxu0 0.0
      %595 = vmatpush1.msra.mxu0 0.0
      %596 = vmatprep.subr.mxu0 0.0
      %597 = vmatpush1.msra.mxu0 0.0
      %598 = vmatprep.subr.mxu0 0.0
      %599 = vmatpush1.msra.mxu0 0.0
      %600 = vmatprep.subr.mxu0 0.0
      %601 = vmatpush1.msra.mxu0 0.0
      %602 = vmatprep.subr.mxu0 0.0
      %603 = vmatpush1.msra.mxu0 0.0
      %604 = vmatprep.subr.mxu0 0.0
      %605 = vmatpush1.msra.mxu0 0.0
      %606 = vmatprep.subr.mxu0 0.0
      %607 = vmatpush1.msra.mxu0 0.0
      %608 = vmatprep.subr.mxu0 0.0
      %609 = vmatpush1.msra.mxu0 0.0
      %610 = vmatprep.subr.mxu0 0.0
      %611 = vmatpush1.msra.mxu0 0.0
      %612 = vmatprep.subr.mxu0 0.0
      %613 = vmatpush1.msra.mxu0 0.0
      %614 = vmatprep.subr.mxu0 0.0
      %615 = vmatpush1.msra.mxu0 0.0
      %616 = vmatprep.subr.mxu0 0.0
      %617 = vmatpush1.msra.mxu0 0.0
      %618 = vmatprep.subr.mxu0 0.0
      %619 = vmatpush1.msra.mxu0 0.0
      %620 = vmatprep.mubr.f32.mxu0 0.0
      %621 = vmatmul.mubr.f32.gmra.mrb[0].mxu0 %v529
      %v622 = vpop.f32.mrb[0].mxu0
      %v623 = vadd.f32 0.0, %v622
      %v624 = vpop.f32.mrb[0].mxu0
      %v625 = vadd.f32 0.0, %v624
      %626 = vmatprep.mubr.f32.mxu0 0.0
      %627 = vmatmul.mubr.f32.gmra.mrb[0].mxu0 %v532
      %v628 = vpop.f32.mrb[0].mxu0
      %v629 = vadd.f32 0.0, %v628
      %v630 = vpop.f32.mrb[0].mxu0
      %v631 = vadd.f32 0.0, %v630
      %632 = vmatprep.mubr.f32.mxu0 0.0
      %633 = vmatmul.mubr.f32.gmra.mrb[0].mxu0 %v535
      %v634 = vpop.f32.mrb[0].mxu0
      %v635 = vadd.f32 0.0, %v634
      %v636 = vpop.f32.mrb[0].mxu0
      %v637 = vadd.f32 0.0, %v636
      %638 = vmatprep.mubr.f32.mxu0 0.0
      %639 = vmatmul.mubr.f32.gmra.mrb[0].mxu0 %v538
      %v640 = vpop.f32.mrb[0].mxu0
      %v641 = vadd.f32 0.0, %v640
      %v642 = vpop.f32.mrb[0].mxu0
      %v643 = vadd.f32 0.0, %v642
      %644 = vmatprep.mubr.f32.mxu0 0.0
      %645 = vmatmul.mubr.f32.gmra.mrb[0].mxu0 %v541
      %v646 = vpop.f32.mrb[0].mxu0
      %v647 = vadd.f32 0.0, %v646
      %v648 = vpop.f32.mrb[0].mxu0
      %v649 = vadd.f32 0.0, %v648
      %650 = vmatprep.mubr.f32.mxu0 0.0
      %651 = vmatmul.mubr.f32.gmra.mrb[0].mxu0 %v544
      %v652 = vpop.f32.mrb[0].mxu0
      %v653 = vadd.f32 0.0, %v652
      %v654 = vpop.f32.mrb[0].mxu0
      %v655 = vadd.f32 0.0, %v654
      %656 = vmatprep.mubr.f32.mxu0 0.0
      %657 = vmatmul.mubr.f32.gmra.mrb[0].mxu0 %v547
      %v658 = vpop.f32.mrb[0].mxu0
      %v659 = vadd.f32 0.0, %v658
      %v660 = vpop.f32.mrb[0].mxu0
      %v661 = vadd.f32 0.0, %v660
      %662 = vmatprep.mubr.f32.mxu0 0.0
      %663 = vmatmul.mubr.f32.gmra.mrb[0].mxu0 %v550
      %v664 = vpop.f32.mrb[0].mxu0
      %v665 = vadd.f32 0.0, %v664
      %v666 = vpop.f32.mrb[0].mxu0
      %v667 = vadd.f32 0.0, %v666
      %668 = vdwg.mxu0
      %v669 = vld [vmem:[#allocation3] sm:$0xff]
      %v670 = vld [vmem:[#allocation3 + $0x8] sm:$0xff]
      %v671 = vld [vmem:[#allocation3 + $0x10] sm:$0xff]
      %v672 = vld [vmem:[#allocation3 + $0x18] sm:$0xff]
      %v673 = vld [vmem:[#allocation3 + $0x20] sm:$0xff]
      %v674 = vld [vmem:[#allocation3 + $0x28] sm:$0xff]
      %v675 = vld [vmem:[#allocation3 + $0x30] sm:$0xff]
      %v676 = vld [vmem:[#allocation3 + $0x38] sm:$0xff]
      %v677 = vld [vmem:[#allocation3 + $0x40] sm:$0xff]
      %v678 = vld [vmem:[#allocation3 + $0x48] sm:$0xff]
      %v679 = vld [vmem:[#allocation3 + $0x50] sm:$0xff]
      %v680 = vld [vmem:[#allocation3 + $0x58] sm:$0xff]
      %v681 = vld [vmem:[#allocation3 + $0x60] sm:$0xff]
      %v682 = vld [vmem:[#allocation3 + $0x68] sm:$0xff]
      %v683 = vld [vmem:[#allocation3 + $0x70] sm:$0xff]
      %v684 = vld [vmem:[#allocation3 + $0x78] sm:$0xff]
      %v685 = vadd.f32 %v669, %v623
      %v686 = vadd.f32 %v670, %v625
      %v687 = vadd.f32 %v671, %v629
      %v688 = vadd.f32 %v672, %v631
      %v689 = vadd.f32 %v673, %v635
      %v690 = vadd.f32 %v674, %v637
      %v691 = vadd.f32 %v675, %v641
      %v692 = vadd.f32 %v676, %v643
      %v693 = vadd.f32 %v677, %v647
      %v694 = vadd.f32 %v678, %v649
      %v695 = vadd.f32 %v679, %v653
      %v696 = vadd.f32 %v680, %v655
      %v697 = vadd.f32 %v681, %v659
      %v698 = vadd.f32 %v682, %v661
      %v699 = vadd.f32 %v683, %v665
      %v700 = vadd.f32 %v684, %v667
      %701 = vst [vmem:[#allocation3] sm:$0xff] %v685
      %702 = vst [vmem:[#allocation3 + $0x8] sm:$0xff] %v686
      %703 = vst [vmem:[#allocation3 + $0x10] sm:$0xff] %v687
      %704 = vst [vmem:[#allocation3 + $0x18] sm:$0xff] %v688
      %705 = vst [vmem:[#allocation3 + $0x20] sm:$0xff] %v689
      %706 = vst [vmem:[#allocation3 + $0x28] sm:$0xff] %v690
      %707 = vst [vmem:[#allocation3 + $0x30] sm:$0xff] %v691
      %708 = vst [vmem:[#allocation3 + $0x38] sm:$0xff] %v692
      %709 = vst [vmem:[#allocation3 + $0x40] sm:$0xff] %v693
      %710 = vst [vmem:[#allocation3 + $0x48] sm:$0xff] %v694
      %711 = vst [vmem:[#allocation3 + $0x50] sm:$0xff] %v695
      %712 = vst [vmem:[#allocation3 + $0x58] sm:$0xff] %v696
      %713 = vst [vmem:[#allocation3 + $0x60] sm:$0xff] %v697
      %714 = vst [vmem:[#allocation3 + $0x68] sm:$0xff] %v698
      %715 = vst [vmem:[#allocation3 + $0x70] sm:$0xff] %v699
      %716 = vst [vmem:[#allocation3 + $0x78] sm:$0xff] %v700
      %v717 = vld [vmem:[#allocation2] sm:$0xff]
      %v718 = vld [vmem:[#allocation2 + $0x8] sm:$0xf]
      %v719 = vsel %vm312, 1, 0
      %v720 = vsel %vm313, 1, 0
      %vm721 = vcmp.eq.s32.totalorder %v719, 1
      %vm722 = vcmp.eq.s32.totalorder %v720, 1
      %v725 = vcombine.high %v717, %v717
      %726 = vrot.lane.b32.xlu0 %v717, 15
      %v727 = vpop.permute.xlu0 %726
      %728 = vrot.lane.b32.xlu0 %v725, 15
      %v729 = vpop.permute.xlu0 %728
      %730 = vrot.lane.b32.xlu0 %v718, 15
      %v731 = vpop.permute.xlu0 %730
      %vm732 = vcmask 121856
      %v733 = vsel %vm732, %v727, %v729
      %v734 = vsel %vm732, %v729, %v731
      %v737 = vsel %vm721, %v733, 0.0
      %v738 = vsel %vm722, %v734, 0.0
      %s739 = scalar_lea.vmem %s1, 128
      %v740 = vld [vmem:[%s739] sm:$0xff]
      %v741 = vld [vmem:[%s739 + $0x8] sm:$0xff]
      %v742 = vld [vmem:[%s739 + $0x10] sm:$0xff]
      %v743 = vld [vmem:[%s739 + $0x18] sm:$0xff]
      %v744 = vld [vmem:[%s739 + $0x20] sm:$0xff]
      %v745 = vld [vmem:[%s739 + $0x28] sm:$0xff]
      %v746 = vld [vmem:[%s739 + $0x30] sm:$0xff]
      %v747 = vld [vmem:[%s739 + $0x38] sm:$0xff]
      %v749 = vsel %vm344, %v740, 0
      %v752 = vsel %vm344, %v741, 0
      %v755 = vsel %vm344, %v742, 0
      %v758 = vsel %vm344, %v743, 0
      %v761 = vsel %vm344, %v744, 0
      %v764 = vsel %vm344, %v745, 0
      %v767 = vsel %vm344, %v746, 0
      %v770 = vsel %vm344, %v747, 0
      %v773 = vsel %vm369, %v737, 0
      %v776 = vsel %vm369, %v738, 0
      %778 = vmatprep.subr.mxu0 %v776
      %779 = vmatpush1.msra.mxu0 %v773
      %780 = vmatprep.subr.mxu0 0.0
      %781 = vmatpush1.msra.mxu0 0.0
      %782 = vmatprep.subr.mxu0 0.0
      %783 = vmatpush1.msra.mxu0 0.0
      %784 = vmatprep.subr.mxu0 0.0
      %785 = vmatpush1.msra.mxu0 0.0
      %786 = vmatprep.subr.mxu0 0.0
      %787 = vmatpush1.msra.mxu0 0.0
      %788 = vmatprep.subr.mxu0 0.0
      %789 = vmatpush1.msra.mxu0 0.0
      %790 = vmatprep.subr.mxu0 0.0
      %791 = vmatpush1.msra.mxu0 0.0
      %792 = vmatprep.subr.mxu0 0.0
      %793 = vmatpush1.msra.mxu0 0.0
      %794 = vmatprep.subr.mxu0 0.0
      %795 = vmatpush1.msra.mxu0 0.0
      %796 = vmatprep.subr.mxu0 0.0
      %797 = vmatpush1.msra.mxu0 0.0
      %798 = vmatprep.subr.mxu0 0.0
      %799 = vmatpush1.msra.mxu0 0.0
      %800 = vmatprep.subr.mxu0 0.0
      %801 = vmatpush1.msra.mxu0 0.0
      %802 = vmatprep.subr.mxu0 0.0
      %803 = vmatpush1.msra.mxu0 0.0
      %804 = vmatprep.subr.mxu0 0.0
      %805 = vmatpush1.msra.mxu0 0.0
      %806 = vmatprep.subr.mxu0 0.0
      %807 = vmatpush1.msra.mxu0 0.0
      %808 = vmatprep.subr.mxu0 0.0
      %809 = vmatpush1.msra.mxu0 0.0
      %810 = vmatprep.subr.mxu0 0.0
      %811 = vmatpush1.msra.mxu0 0.0
      %812 = vmatprep.subr.mxu0 0.0
      %813 = vmatpush1.msra.mxu0 0.0
      %814 = vmatprep.subr.mxu0 0.0
      %815 = vmatpush1.msra.mxu0 0.0
      %816 = vmatprep.subr.mxu0 0.0
      %817 = vmatpush1.msra.mxu0 0.0
      %818 = vmatprep.subr.mxu0 0.0
      %819 = vmatpush1.msra.mxu0 0.0
      %820 = vmatprep.subr.mxu0 0.0
      %821 = vmatpush1.msra.mxu0 0.0
      %822 = vmatprep.subr.mxu0 0.0
      %823 = vmatpush1.msra.mxu0 0.0
      %824 = vmatprep.subr.mxu0 0.0
      %825 = vmatpush1.msra.mxu0 0.0
      %826 = vmatprep.subr.mxu0 0.0
      %827 = vmatpush1.msra.mxu0 0.0
      %828 = vmatprep.subr.mxu0 0.0
      %829 = vmatpush1.msra.mxu0 0.0
      %830 = vmatprep.subr.mxu0 0.0
      %831 = vmatpush1.msra.mxu0 0.0
      %832 = vmatprep.subr.mxu0 0.0
      %833 = vmatpush1.msra.mxu0 0.0
      %834 = vmatprep.subr.mxu0 0.0
      %835 = vmatpush1.msra.mxu0 0.0
      %836 = vmatprep.subr.mxu0 0.0
      %837 = vmatpush1.msra.mxu0 0.0
      %838 = vmatprep.subr.mxu0 0.0
      %839 = vmatpush1.msra.mxu0 0.0
      %840 = vmatprep.subr.mxu0 0.0
      %841 = vmatpush1.msra.mxu0 0.0
      %842 = vmatprep.mubr.f32.mxu0 0.0
      %843 = vmatmul.mubr.f32.gmra.mrb[0].mxu0 %v749
      %v844 = vpop.f32.mrb[0].mxu0
      %v845 = vadd.f32 0.0, %v844
      %v846 = vpop.f32.mrb[0].mxu0
      %v847 = vadd.f32 0.0, %v846
      %848 = vmatprep.mubr.f32.mxu0 0.0
      %849 = vmatmul.mubr.f32.gmra.mrb[0].mxu0 %v752
      %v850 = vpop.f32.mrb[0].mxu0
      %v851 = vadd.f32 0.0, %v850
      %v852 = vpop.f32.mrb[0].mxu0
      %v853 = vadd.f32 0.0, %v852
      %854 = vmatprep.mubr.f32.mxu0 0.0
      %855 = vmatmul.mubr.f32.gmra.mrb[0].mxu0 %v755
      %v856 = vpop.f32.mrb[0].mxu0
      %v857 = vadd.f32 0.0, %v856
      %v858 = vpop.f32.mrb[0].mxu0
      %v859 = vadd.f32 0.0, %v858
      %860 = vmatprep.mubr.f32.mxu0 0.0
      %861 = vmatmul.mubr.f32.gmra.mrb[0].mxu0 %v758
      %v862 = vpop.f32.mrb[0].mxu0
      %v863 = vadd.f32 0.0, %v862
      %v864 = vpop.f32.mrb[0].mxu0
      %v865 = vadd.f32 0.0, %v864
      %866 = vmatprep.mubr.f32.mxu0 0.0
      %867 = vmatmul.mubr.f32.gmra.mrb[0].mxu0 %v761
      %v868 = vpop.f32.mrb[0].mxu0
      %v869 = vadd.f32 0.0, %v868
      %v870 = vpop.f32.mrb[0].mxu0
      %v871 = vadd.f32 0.0, %v870
      %872 = vmatprep.mubr.f32.mxu0 0.0
      %873 = vmatmul.mubr.f32.gmra.mrb[0].mxu0 %v764
      %v874 = vpop.f32.mrb[0].mxu0
      %v875 = vadd.f32 0.0, %v874
      %v876 = vpop.f32.mrb[0].mxu0
      %v877 = vadd.f32 0.0, %v876
      %878 = vmatprep.mubr.f32.mxu0 0.0
      %879 = vmatmul.mubr.f32.gmra.mrb[0].mxu0 %v767
      %v880 = vpop.f32.mrb[0].mxu0
      %v881 = vadd.f32 0.0, %v880
      %v882 = vpop.f32.mrb[0].mxu0
      %v883 = vadd.f32 0.0, %v882
      %884 = vmatprep.mubr.f32.mxu0 0.0
      %885 = vmatmul.mubr.f32.gmra.mrb[0].mxu0 %v770
      %v886 = vpop.f32.mrb[0].mxu0
      %v887 = vadd.f32 0.0, %v886
      %v888 = vpop.f32.mrb[0].mxu0
      %v889 = vadd.f32 0.0, %v888
      %890 = vdwg.mxu0
      %v891 = vld [vmem:[#allocation3] sm:$0xff]
      %v892 = vld [vmem:[#allocation3 + $0x8] sm:$0xff]
      %v893 = vld [vmem:[#allocation3 + $0x10] sm:$0xff]
      %v894 = vld [vmem:[#allocation3 + $0x18] sm:$0xff]
      %v895 = vld [vmem:[#allocation3 + $0x20] sm:$0xff]
      %v896 = vld [vmem:[#allocation3 + $0x28] sm:$0xff]
      %v897 = vld [vmem:[#allocation3 + $0x30] sm:$0xff]
      %v898 = vld [vmem:[#allocation3 + $0x38] sm:$0xff]
      %v899 = vld [vmem:[#allocation3 + $0x40] sm:$0xff]
      %v900 = vld [vmem:[#allocation3 + $0x48] sm:$0xff]
      %v901 = vld [vmem:[#allocation3 + $0x50] sm:$0xff]
      %v902 = vld [vmem:[#allocation3 + $0x58] sm:$0xff]
      %v903 = vld [vmem:[#allocation3 + $0x60] sm:$0xff]
      %v904 = vld [vmem:[#allocation3 + $0x68] sm:$0xff]
      %v905 = vld [vmem:[#allocation3 + $0x70] sm:$0xff]
      %v906 = vld [vmem:[#allocation3 + $0x78] sm:$0xff]
      %v907 = vadd.f32 %v891, %v845
      %v908 = vadd.f32 %v892, %v847
      %v909 = vadd.f32 %v893, %v851
      %v910 = vadd.f32 %v894, %v853
      %v911 = vadd.f32 %v895, %v857
      %v912 = vadd.f32 %v896, %v859
      %v913 = vadd.f32 %v897, %v863
      %v914 = vadd.f32 %v898, %v865
      %v915 = vadd.f32 %v899, %v869
      %v916 = vadd.f32 %v900, %v871
      %v917 = vadd.f32 %v901, %v875
      %v918 = vadd.f32 %v902, %v877
      %v919 = vadd.f32 %v903, %v881
      %v920 = vadd.f32 %v904, %v883
      %v921 = vadd.f32 %v905, %v887
      %v922 = vadd.f32 %v906, %v889
      %923 = vst [vmem:[#allocation3] sm:$0xff] %v907
      %924 = vst [vmem:[#allocation3 + $0x8] sm:$0xff] %v908
      %925 = vst [vmem:[#allocation3 + $0x10] sm:$0xff] %v909
      %926 = vst [vmem:[#allocation3 + $0x18] sm:$0xff] %v910
      %927 = vst [vmem:[#allocation3 + $0x20] sm:$0xff] %v911
      %928 = vst [vmem:[#allocation3 + $0x28] sm:$0xff] %v912
      %929 = vst [vmem:[#allocation3 + $0x30] sm:$0xff] %v913
      %930 = vst [vmem:[#allocation3 + $0x38] sm:$0xff] %v914
      %931 = vst [vmem:[#allocation3 + $0x40] sm:$0xff] %v915
      %932 = vst [vmem:[#allocation3 + $0x48] sm:$0xff] %v916
      %933 = vst [vmem:[#allocation3 + $0x50] sm:$0xff] %v917
      %934 = vst [vmem:[#allocation3 + $0x58] sm:$0xff] %v918
      %935 = vst [vmem:[#allocation3 + $0x60] sm:$0xff] %v919
      %936 = vst [vmem:[#allocation3 + $0x68] sm:$0xff] %v920
      %937 = vst [vmem:[#allocation3 + $0x70] sm:$0xff] %v921
      %938 = vst [vmem:[#allocation3 + $0x78] sm:$0xff] %v922
      %v939 = vld [vmem:[#allocation2] sm:$0xff]
      %v940 = vld [vmem:[#allocation2 + $0x8] sm:$0xf]
      %v943 = vcombine.high %v939, %v939
      %944 = vrot.lane.b32.xlu0 %v939, 1
      %v945 = vpop.permute.xlu0 %944
      %946 = vrot.lane.b32.xlu0 %v943, 1
      %v947 = vpop.permute.xlu0 %946
      %948 = vrot.lane.b32.xlu0 %v940, 1
      %v949 = vpop.permute.xlu0 %948
      %vm950 = vcmask 7168
      %v951 = vsel %vm950, %v945, %v947
      %v952 = vsel %vm950, %v947, %v949
      %v955 = vsel %vm318, %v951, 0.0
      %v956 = vsel %vm319, %v952, 0.0
      %s957 = scalar_lea.vmem %s1, 192
      %v958 = vld [vmem:[%s957] sm:$0xff]
      %v959 = vld [vmem:[%s957 + $0x8] sm:$0xff]
      %v960 = vld [vmem:[%s957 + $0x10] sm:$0xff]
      %v961 = vld [vmem:[%s957 + $0x18] sm:$0xff]
      %v962 = vld [vmem:[%s957 + $0x20] sm:$0xff]
      %v963 = vld [vmem:[%s957 + $0x28] sm:$0xff]
      %v964 = vld [vmem:[%s957 + $0x30] sm:$0xff]
      %v965 = vld [vmem:[%s957 + $0x38] sm:$0xff]
      %v967 = vsel %vm344, %v958, 0
      %v970 = vsel %vm344, %v959, 0
      %v973 = vsel %vm344, %v960, 0
      %v976 = vsel %vm344, %v961, 0
      %v979 = vsel %vm344, %v962, 0
      %v982 = vsel %vm344, %v963, 0
      %v985 = vsel %vm344, %v964, 0
      %v988 = vsel %vm344, %v965, 0
      %v991 = vsel %vm369, %v955, 0
      %v994 = vsel %vm369, %v956, 0
      %996 = vmatprep.subr.mxu0 %v994
      %997 = vmatpush1.msra.mxu0 %v991
      %998 = vmatprep.subr.mxu0 0.0
      %999 = vmatpush1.msra.mxu0 0.0
      %1000 = vmatprep.subr.mxu0 0.0
      %1001 = vmatpush1.msra.mxu0 0.0
      %1002 = vmatprep.subr.mxu0 0.0
      %1003 = vmatpush1.msra.mxu0 0.0
      %1004 = vmatprep.subr.mxu0 0.0
      %1005 = vmatpush1.msra.mxu0 0.0
      %1006 = vmatprep.subr.mxu0 0.0
      %1007 = vmatpush1.msra.mxu0 0.0
      %1008 = vmatprep.subr.mxu0 0.0
      %1009 = vmatpush1.msra.mxu0 0.0
      %1010 = vmatprep.subr.mxu0 0.0
      %1011 = vmatpush1.msra.mxu0 0.0
      %1012 = vmatprep.subr.mxu0 0.0
      %1013 = vmatpush1.msra.mxu0 0.0
      %1014 = vmatprep.subr.mxu0 0.0
      %1015 = vmatpush1.msra.mxu0 0.0
      %1016 = vmatprep.subr.mxu0 0.0
      %1017 = vmatpush1.msra.mxu0 0.0
      %1018 = vmatprep.subr.mxu0 0.0
      %1019 = vmatpush1.msra.mxu0 0.0
      %1020 = vmatprep.subr.mxu0 0.0
      %1021 = vmatpush1.msra.mxu0 0.0
      %1022 = vmatprep.subr.mxu0 0.0
      %1023 = vmatpush1.msra.mxu0 0.0
      %1024 = vmatprep.subr.mxu0 0.0
      %1025 = vmatpush1.msra.mxu0 0.0
      %1026 = vmatprep.subr.mxu0 0.0
      %1027 = vmatpush1.msra.mxu0 0.0
      %1028 = vmatprep.subr.mxu0 0.0
      %1029 = vmatpush1.msra.mxu0 0.0
      %1030 = vmatprep.subr.mxu0 0.0
      %1031 = vmatpush1.msra.mxu0 0.0
      %1032 = vmatprep.subr.mxu0 0.0
      %1033 = vmatpush1.msra.mxu0 0.0
      %1034 = vmatprep.subr.mxu0 0.0
      %1035 = vmatpush1.msra.mxu0 0.0
      %1036 = vmatprep.subr.mxu0 0.0
      %1037 = vmatpush1.msra.mxu0 0.0
      %1038 = vmatprep.subr.mxu0 0.0
      %1039 = vmatpush1.msra.mxu0 0.0
      %1040 = vmatprep.subr.mxu0 0.0
      %1041 = vmatpush1.msra.mxu0 0.0
      %1042 = vmatprep.subr.mxu0 0.0
      %1043 = vmatpush1.msra.mxu0 0.0
      %1044 = vmatprep.subr.mxu0 0.0
      %1045 = vmatpush1.msra.mxu0 0.0
      %1046 = vmatprep.subr.mxu0 0.0
      %1047 = vmatpush1.msra.mxu0 0.0
      %1048 = vmatprep.subr.mxu0 0.0
      %1049 = vmatpush1.msra.mxu0 0.0
      %1050 = vmatprep.subr.mxu0 0.0
      %1051 = vmatpush1.msra.mxu0 0.0
      %1052 = vmatprep.subr.mxu0 0.0
      %1053 = vmatpush1.msra.mxu0 0.0
      %1054 = vmatprep.subr.mxu0 0.0
      %1055 = vmatpush1.msra.mxu0 0.0
      %1056 = vmatprep.subr.mxu0 0.0
      %1057 = vmatpush1.msra.mxu0 0.0
      %1058 = vmatprep.subr.mxu0 0.0
      %1059 = vmatpush1.msra.mxu0 0.0
      %1060 = vmatprep.mubr.f32.mxu0 0.0
      %1061 = vmatmul.mubr.f32.gmra.mrb[0].mxu0 %v967
      %v1062 = vpop.f32.mrb[0].mxu0
      %v1063 = vadd.f32 0.0, %v1062
      %v1064 = vpop.f32.mrb[0].mxu0
      %v1065 = vadd.f32 0.0, %v1064
      %1066 = vmatprep.mubr.f32.mxu0 0.0
      %1067 = vmatmul.mubr.f32.gmra.mrb[0].mxu0 %v970
      %v1068 = vpop.f32.mrb[0].mxu0
      %v1069 = vadd.f32 0.0, %v1068
      %v1070 = vpop.f32.mrb[0].mxu0
      %v1071 = vadd.f32 0.0, %v1070
      %1072 = vmatprep.mubr.f32.mxu0 0.0
      %1073 = vmatmul.mubr.f32.gmra.mrb[0].mxu0 %v973
      %v1074 = vpop.f32.mrb[0].mxu0
      %v1075 = vadd.f32 0.0, %v1074
      %v1076 = vpop.f32.mrb[0].mxu0
      %v1077 = vadd.f32 0.0, %v1076
      %1078 = vmatprep.mubr.f32.mxu0 0.0
      %1079 = vmatmul.mubr.f32.gmra.mrb[0].mxu0 %v976
      %v1080 = vpop.f32.mrb[0].mxu0
      %v1081 = vadd.f32 0.0, %v1080
      %v1082 = vpop.f32.mrb[0].mxu0
      %v1083 = vadd.f32 0.0, %v1082
      %1084 = vmatprep.mubr.f32.mxu0 0.0
      %1085 = vmatmul.mubr.f32.gmra.mrb[0].mxu0 %v979
      %v1086 = vpop.f32.mrb[0].mxu0
      %v1087 = vadd.f32 0.0, %v1086
      %v1088 = vpop.f32.mrb[0].mxu0
      %v1089 = vadd.f32 0.0, %v1088
      %1090 = vmatprep.mubr.f32.mxu0 0.0
      %1091 = vmatmul.mubr.f32.gmra.mrb[0].mxu0 %v982
      %v1092 = vpop.f32.mrb[0].mxu0
      %v1093 = vadd.f32 0.0, %v1092
      %v1094 = vpop.f32.mrb[0].mxu0
      %v1095 = vadd.f32 0.0, %v1094
      %1096 = vmatprep.mubr.f32.mxu0 0.0
      %1097 = vmatmul.mubr.f32.gmra.mrb[0].mxu0 %v985
      %v1098 = vpop.f32.mrb[0].mxu0
      %v1099 = vadd.f32 0.0, %v1098
      %v1100 = vpop.f32.mrb[0].mxu0
      %v1101 = vadd.f32 0.0, %v1100
      %1102 = vmatprep.mubr.f32.mxu0 0.0
      %1103 = vmatmul.mubr.f32.gmra.mrb[0].mxu0 %v988
      %v1104 = vpop.f32.mrb[0].mxu0
      %v1105 = vadd.f32 0.0, %v1104
      %v1106 = vpop.f32.mrb[0].mxu0
      %v1107 = vadd.f32 0.0, %v1106
      %1108 = vdwg.mxu0
      %v1109 = vld [vmem:[#allocation3] sm:$0xff]
      %v1110 = vld [vmem:[#allocation3 + $0x8] sm:$0xff]
      %v1111 = vld [vmem:[#allocation3 + $0x10] sm:$0xff]
      %v1112 = vld [vmem:[#allocation3 + $0x18] sm:$0xff]
      %v1113 = vld [vmem:[#allocation3 + $0x20] sm:$0xff]
      %v1114 = vld [vmem:[#allocation3 + $0x28] sm:$0xff]
      %v1115 = vld [vmem:[#allocation3 + $0x30] sm:$0xff]
      %v1116 = vld [vmem:[#allocation3 + $0x38] sm:$0xff]
      %v1117 = vld [vmem:[#allocation3 + $0x40] sm:$0xff]
      %v1118 = vld [vmem:[#allocation3 + $0x48] sm:$0xff]
      %v1119 = vld [vmem:[#allocation3 + $0x50] sm:$0xff]
      %v1120 = vld [vmem:[#allocation3 + $0x58] sm:$0xff]
      %v1121 = vld [vmem:[#allocation3 + $0x60] sm:$0xff]
      %v1122 = vld [vmem:[#allocation3 + $0x68] sm:$0xff]
      %v1123 = vld [vmem:[#allocation3 + $0x70] sm:$0xff]
      %v1124 = vld [vmem:[#allocation3 + $0x78] sm:$0xff]
      %v1125 = vadd.f32 %v1109, %v1063
      %v1126 = vadd.f32 %v1110, %v1065
      %v1127 = vadd.f32 %v1111, %v1069
      %v1128 = vadd.f32 %v1112, %v1071
      %v1129 = vadd.f32 %v1113, %v1075
      %v1130 = vadd.f32 %v1114, %v1077
      %v1131 = vadd.f32 %v1115, %v1081
      %v1132 = vadd.f32 %v1116, %v1083
      %v1133 = vadd.f32 %v1117, %v1087
      %v1134 = vadd.f32 %v1118, %v1089
      %v1135 = vadd.f32 %v1119, %v1093
      %v1136 = vadd.f32 %v1120, %v1095
      %v1137 = vadd.f32 %v1121, %v1099
      %v1138 = vadd.f32 %v1122, %v1101
      %v1139 = vadd.f32 %v1123, %v1105
      %v1140 = vadd.f32 %v1124, %v1107
      %1141 = vst [vmem:[#allocation3] sm:$0xff] %v1125
      %1142 = vst [vmem:[#allocation3 + $0x8] sm:$0xff] %v1126
      %1143 = vst [vmem:[#allocation3 + $0x10] sm:$0xff] %v1127
      %1144 = vst [vmem:[#allocation3 + $0x18] sm:$0xff] %v1128
      %1145 = vst [vmem:[#allocation3 + $0x20] sm:$0xff] %v1129
      %1146 = vst [vmem:[#allocation3 + $0x28] sm:$0xff] %v1130
      %1147 = vst [vmem:[#allocation3 + $0x30] sm:$0xff] %v1131
      %1148 = vst [vmem:[#allocation3 + $0x38] sm:$0xff] %v1132
      %1149 = vst [vmem:[#allocation3 + $0x40] sm:$0xff] %v1133
      %1150 = vst [vmem:[#allocation3 + $0x48] sm:$0xff] %v1134
      %1151 = vst [vmem:[#allocation3 + $0x50] sm:$0xff] %v1135
      %1152 = vst [vmem:[#allocation3 + $0x58] sm:$0xff] %v1136
      %1153 = vst [vmem:[#allocation3 + $0x60] sm:$0xff] %v1137
      %1154 = vst [vmem:[#allocation3 + $0x68] sm:$0xff] %v1138
      %1155 = vst [vmem:[#allocation3 + $0x70] sm:$0xff] %v1139
      %1156 = vst [vmem:[#allocation3 + $0x78] sm:$0xff] %v1140
      %v1157 = vld [vmem:[#allocation2 + $0x4] sm:$0xff]
      %s1158 = scalar_lea.vmem %s1, 256
      %v1159 = vld [vmem:[%s1158] sm:$0xff]
      %v1160 = vld [vmem:[%s1158 + $0x8] sm:$0xff]
      %v1161 = vld [vmem:[%s1158 + $0x10] sm:$0xff]
      %v1162 = vld [vmem:[%s1158 + $0x18] sm:$0xff]
      %v1163 = vld [vmem:[%s1158 + $0x20] sm:$0xff]
      %v1164 = vld [vmem:[%s1158 + $0x28] sm:$0xff]
      %v1165 = vld [vmem:[%s1158 + $0x30] sm:$0xff]
      %v1166 = vld [vmem:[%s1158 + $0x38] sm:$0xff]
      %v1168 = vcombine.high %v1157, %v1157
      %v1170 = vsel %vm344, %v1159, 0
      %v1173 = vsel %vm344, %v1160, 0
      %v1176 = vsel %vm344, %v1161, 0
      %v1179 = vsel %vm344, %v1162, 0
      %v1182 = vsel %vm344, %v1163, 0
      %v1185 = vsel %vm344, %v1164, 0
      %v1188 = vsel %vm344, %v1165, 0
      %v1191 = vsel %vm344, %v1166, 0
      %v1193 = vsel %vm369, %v1157, 0
      %v1195 = vsel %vm369, %v1168, 0
      %1197 = vmatprep.subr.mxu0 %v1195
      %1198 = vmatpush1.msra.mxu0 %v1193
      %1199 = vmatprep.subr.mxu0 0.0
      %1200 = vmatpush1.msra.mxu0 0.0
      %1201 = vmatprep.subr.mxu0 0.0
      %1202 = vmatpush1.msra.mxu0 0.0
      %1203 = vmatprep.subr.mxu0 0.0
      %1204 = vmatpush1.msra.mxu0 0.0
      %1205 = vmatprep.subr.mxu0 0.0
      %1206 = vmatpush1.msra.mxu0 0.0
      %1207 = vmatprep.subr.mxu0 0.0
      %1208 = vmatpush1.msra.mxu0 0.0
      %1209 = vmatprep.subr.mxu0 0.0
      %1210 = vmatpush1.msra.mxu0 0.0
      %1211 = vmatprep.subr.mxu0 0.0
      %1212 = vmatpush1.msra.mxu0 0.0
      %1213 = vmatprep.subr.mxu0 0.0
      %1214 = vmatpush1.msra.mxu0 0.0
      %1215 = vmatprep.subr.mxu0 0.0
      %1216 = vmatpush1.msra.mxu0 0.0
      %1217 = vmatprep.subr.mxu0 0.0
      %1218 = vmatpush1.msra.mxu0 0.0
      %1219 = vmatprep.subr.mxu0 0.0
      %1220 = vmatpush1.msra.mxu0 0.0
      %1221 = vmatprep.subr.mxu0 0.0
      %1222 = vmatpush1.msra.mxu0 0.0
      %1223 = vmatprep.subr.mxu0 0.0
      %1224 = vmatpush1.msra.mxu0 0.0
      %1225 = vmatprep.subr.mxu0 0.0
      %1226 = vmatpush1.msra.mxu0 0.0
      %1227 = vmatprep.subr.mxu0 0.0
      %1228 = vmatpush1.msra.mxu0 0.0
      %1229 = vmatprep.subr.mxu0 0.0
      %1230 = vmatpush1.msra.mxu0 0.0
      %1231 = vmatprep.subr.mxu0 0.0
      %1232 = vmatpush1.msra.mxu0 0.0
      %1233 = vmatprep.subr.mxu0 0.0
      %1234 = vmatpush1.msra.mxu0 0.0
      %1235 = vmatprep.subr.mxu0 0.0
      %1236 = vmatpush1.msra.mxu0 0.0
      %1237 = vmatprep.subr.mxu0 0.0
      %1238 = vmatpush1.msra.mxu0 0.0
      %1239 = vmatprep.subr.mxu0 0.0
      %1240 = vmatpush1.msra.mxu0 0.0
      %1241 = vmatprep.subr.mxu0 0.0
      %1242 = vmatpush1.msra.mxu0 0.0
      %1243 = vmatprep.subr.mxu0 0.0
      %1244 = vmatpush1.msra.mxu0 0.0
      %1245 = vmatprep.subr.mxu0 0.0
      %1246 = vmatpush1.msra.mxu0 0.0
      %1247 = vmatprep.subr.mxu0 0.0
      %1248 = vmatpush1.msra.mxu0 0.0
      %1249 = vmatprep.subr.mxu0 0.0
      %1250 = vmatpush1.msra.mxu0 0.0
      %1251 = vmatprep.subr.mxu0 0.0
      %1252 = vmatpush1.msra.mxu0 0.0
      %1253 = vmatprep.subr.mxu0 0.0
      %1254 = vmatpush1.msra.mxu0 0.0
      %1255 = vmatprep.subr.mxu0 0.0
      %1256 = vmatpush1.msra.mxu0 0.0
      %1257 = vmatprep.subr.mxu0 0.0
      %1258 = vmatpush1.msra.mxu0 0.0
      %1259 = vmatprep.subr.mxu0 0.0
      %1260 = vmatpush1.msra.mxu0 0.0
      %1261 = vmatprep.mubr.f32.mxu0 0.0
      %1262 = vmatmul.mubr.f32.gmra.mrb[0].mxu0 %v1170
      %v1263 = vpop.f32.mrb[0].mxu0
      %v1264 = vadd.f32 0.0, %v1263
      %v1265 = vpop.f32.mrb[0].mxu0
      %v1266 = vadd.f32 0.0, %v1265
      %1267 = vmatprep.mubr.f32.mxu0 0.0
      %1268 = vmatmul.mubr.f32.gmra.mrb[0].mxu0 %v1173
      %v1269 = vpop.f32.mrb[0].mxu0
      %v1270 = vadd.f32 0.0, %v1269
      %v1271 = vpop.f32.mrb[0].mxu0
      %v1272 = vadd.f32 0.0, %v1271
      %1273 = vmatprep.mubr.f32.mxu0 0.0
      %1274 = vmatmul.mubr.f32.gmra.mrb[0].mxu0 %v1176
      %v1275 = vpop.f32.mrb[0].mxu0
      %v1276 = vadd.f32 0.0, %v1275
      %v1277 = vpop.f32.mrb[0].mxu0
      %v1278 = vadd.f32 0.0, %v1277
      %1279 = vmatprep.mubr.f32.mxu0 0.0
      %1280 = vmatmul.mubr.f32.gmra.mrb[0].mxu0 %v1179
      %v1281 = vpop.f32.mrb[0].mxu0
      %v1282 = vadd.f32 0.0, %v1281
      %v1283 = vpop.f32.mrb[0].mxu0
      %v1284 = vadd.f32 0.0, %v1283
      %1285 = vmatprep.mubr.f32.mxu0 0.0
      %1286 = vmatmul.mubr.f32.gmra.mrb[0].mxu0 %v1182
      %v1287 = vpop.f32.mrb[0].mxu0
      %v1288 = vadd.f32 0.0, %v1287
      %v1289 = vpop.f32.mrb[0].mxu0
      %v1290 = vadd.f32 0.0, %v1289
      %1291 = vmatprep.mubr.f32.mxu0 0.0
      %1292 = vmatmul.mubr.f32.gmra.mrb[0].mxu0 %v1185
      %v1293 = vpop.f32.mrb[0].mxu0
      %v1294 = vadd.f32 0.0, %v1293
      %v1295 = vpop.f32.mrb[0].mxu0
      %v1296 = vadd.f32 0.0, %v1295
      %1297 = vmatprep.mubr.f32.mxu0 0.0
      %1298 = vmatmul.mubr.f32.gmra.mrb[0].mxu0 %v1188
      %v1299 = vpop.f32.mrb[0].mxu0
      %v1300 = vadd.f32 0.0, %v1299
      %v1301 = vpop.f32.mrb[0].mxu0
      %v1302 = vadd.f32 0.0, %v1301
      %1303 = vmatprep.mubr.f32.mxu0 0.0
      %1304 = vmatmul.mubr.f32.gmra.mrb[0].mxu0 %v1191
      %v1305 = vpop.f32.mrb[0].mxu0
      %v1306 = vadd.f32 0.0, %v1305
      %v1307 = vpop.f32.mrb[0].mxu0
      %v1308 = vadd.f32 0.0, %v1307
      %1309 = vdwg.mxu0
      %v1310 = vld [vmem:[#allocation3] sm:$0xff]
      %v1311 = vld [vmem:[#allocation3 + $0x8] sm:$0xff]
      %v1312 = vld [vmem:[#allocation3 + $0x10] sm:$0xff]
      %v1313 = vld [vmem:[#allocation3 + $0x18] sm:$0xff]
      %v1314 = vld [vmem:[#allocation3 + $0x20] sm:$0xff]
      %v1315 = vld [vmem:[#allocation3 + $0x28] sm:$0xff]
      %v1316 = vld [vmem:[#allocation3 + $0x30] sm:$0xff]
      %v1317 = vld [vmem:[#allocation3 + $0x38] sm:$0xff]
      %v1318 = vld [vmem:[#allocation3 + $0x40] sm:$0xff]
      %v1319 = vld [vmem:[#allocation3 + $0x48] sm:$0xff]
      %v1320 = vld [vmem:[#allocation3 + $0x50] sm:$0xff]
      %v1321 = vld [vmem:[#allocation3 + $0x58] sm:$0xff]
      %v1322 = vld [vmem:[#allocation3 + $0x60] sm:$0xff]
      %v1323 = vld [vmem:[#allocation3 + $0x68] sm:$0xff]
      %v1324 = vld [vmem:[#allocation3 + $0x70] sm:$0xff]
      %v1325 = vld [vmem:[#allocation3 + $0x78] sm:$0xff]
      %v1326 = vadd.f32 %v1310, %v1264
      %v1327 = vadd.f32 %v1311, %v1266
      %v1328 = vadd.f32 %v1312, %v1270
      %v1329 = vadd.f32 %v1313, %v1272
      %v1330 = vadd.f32 %v1314, %v1276
      %v1331 = vadd.f32 %v1315, %v1278
      %v1332 = vadd.f32 %v1316, %v1282
      %v1333 = vadd.f32 %v1317, %v1284
      %v1334 = vadd.f32 %v1318, %v1288
      %v1335 = vadd.f32 %v1319, %v1290
      %v1336 = vadd.f32 %v1320, %v1294
      %v1337 = vadd.f32 %v1321, %v1296
      %v1338 = vadd.f32 %v1322, %v1300
      %v1339 = vadd.f32 %v1323, %v1302
      %v1340 = vadd.f32 %v1324, %v1306
      %v1341 = vadd.f32 %v1325, %v1308
      %1342 = vst [vmem:[#allocation3] sm:$0xff] %v1326
      %1343 = vst [vmem:[#allocation3 + $0x8] sm:$0xff] %v1327
      %1344 = vst [vmem:[#allocation3 + $0x10] sm:$0xff] %v1328
      %1345 = vst [vmem:[#allocation3 + $0x18] sm:$0xff] %v1329
      %1346 = vst [vmem:[#allocation3 + $0x20] sm:$0xff] %v1330
      %1347 = vst [vmem:[#allocation3 + $0x28] sm:$0xff] %v1331
      %1348 = vst [vmem:[#allocation3 + $0x30] sm:$0xff] %v1332
      %1349 = vst [vmem:[#allocation3 + $0x38] sm:$0xff] %v1333
      %1350 = vst [vmem:[#allocation3 + $0x40] sm:$0xff] %v1334
      %1351 = vst [vmem:[#allocation3 + $0x48] sm:$0xff] %v1335
      %1352 = vst [vmem:[#allocation3 + $0x50] sm:$0xff] %v1336
      %1353 = vst [vmem:[#allocation3 + $0x58] sm:$0xff] %v1337
      %1354 = vst [vmem:[#allocation3 + $0x60] sm:$0xff] %v1338
      %1355 = vst [vmem:[#allocation3 + $0x68] sm:$0xff] %v1339
      %1356 = vst [vmem:[#allocation3 + $0x70] sm:$0xff] %v1340
      %1357 = vst [vmem:[#allocation3 + $0x78] sm:$0xff] %v1341
      %v1358 = vld [vmem:[#allocation2 + $0x4] sm:$0xff]
      %v1359 = vld [vmem:[#allocation2 + $0xc] sm:$0xf]
      %v1362 = vcombine.high %v1358, %v1358
      %1363 = vrot.lane.b32.xlu0 %v1358, 127
      %v1364 = vpop.permute.xlu0 %1363
      %1365 = vrot.lane.b32.xlu0 %v1362, 127
      %v1366 = vpop.permute.xlu0 %1365
      %1367 = vrot.lane.b32.xlu0 %v1359, 127
      %v1368 = vpop.permute.xlu0 %1367
      %vm1369 = vcmask 1039360
      %v1370 = vsel %vm1369, %v1364, %v1366
      %v1371 = vsel %vm1369, %v1366, %v1368
      %v1374 = vsel %vm721, %v1370, 0.0
      %v1375 = vsel %vm722, %v1371, 0.0
      %s1376 = scalar_lea.vmem %s1, 320
      %v1377 = vld [vmem:[%s1376] sm:$0xff]
      %v1378 = vld [vmem:[%s1376 + $0x8] sm:$0xff]
      %v1379 = vld [vmem:[%s1376 + $0x10] sm:$0xff]
      %v1380 = vld [vmem:[%s1376 + $0x18] sm:$0xff]
      %v1381 = vld [vmem:[%s1376 + $0x20] sm:$0xff]
      %v1382 = vld [vmem:[%s1376 + $0x28] sm:$0xff]
      %v1383 = vld [vmem:[%s1376 + $0x30] sm:$0xff]
      %v1384 = vld [vmem:[%s1376 + $0x38] sm:$0xff]
      %v1386 = vsel %vm344, %v1377, 0
      %v1389 = vsel %vm344, %v1378, 0
      %v1392 = vsel %vm344, %v1379, 0
      %v1395 = vsel %vm344, %v1380, 0
      %v1398 = vsel %vm344, %v1381, 0
      %v1401 = vsel %vm344, %v1382, 0
      %v1404 = vsel %vm344, %v1383, 0
      %v1407 = vsel %vm344, %v1384, 0
      %v1410 = vsel %vm369, %v1374, 0
      %v1413 = vsel %vm369, %v1375, 0
      %1415 = vmatprep.subr.mxu0 %v1413
      %1416 = vmatpush1.msra.mxu0 %v1410
      %1417 = vmatprep.subr.mxu0 0.0
      %1418 = vmatpush1.msra.mxu0 0.0
      %1419 = vmatprep.subr.mxu0 0.0
      %1420 = vmatpush1.msra.mxu0 0.0
      %1421 = vmatprep.subr.mxu0 0.0
      %1422 = vmatpush1.msra.mxu0 0.0
      %1423 = vmatprep.subr.mxu0 0.0
      %1424 = vmatpush1.msra.mxu0 0.0
      %1425 = vmatprep.subr.mxu0 0.0
      %1426 = vmatpush1.msra.mxu0 0.0
      %1427 = vmatprep.subr.mxu0 0.0
      %1428 = vmatpush1.msra.mxu0 0.0
      %1429 = vmatprep.subr.mxu0 0.0
      %1430 = vmatpush1.msra.mxu0 0.0
      %1431 = vmatprep.subr.mxu0 0.0
      %1432 = vmatpush1.msra.mxu0 0.0
      %1433 = vmatprep.subr.mxu0 0.0
      %1434 = vmatpush1.msra.mxu0 0.0
      %1435 = vmatprep.subr.mxu0 0.0
      %1436 = vmatpush1.msra.mxu0 0.0
      %1437 = vmatprep.subr.mxu0 0.0
      %1438 = vmatpush1.msra.mxu0 0.0
      %1439 = vmatprep.subr.mxu0 0.0
      %1440 = vmatpush1.msra.mxu0 0.0
      %1441 = vmatprep.subr.mxu0 0.0
      %1442 = vmatpush1.msra.mxu0 0.0
      %1443 = vmatprep.subr.mxu0 0.0
      %1444 = vmatpush1.msra.mxu0 0.0
      %1445 = vmatprep.subr.mxu0 0.0
      %1446 = vmatpush1.msra.mxu0 0.0
      %1447 = vmatprep.subr.mxu0 0.0
      %1448 = vmatpush1.msra.mxu0 0.0
      %1449 = vmatprep.subr.mxu0 0.0
      %1450 = vmatpush1.msra.mxu0 0.0
      %1451 = vmatprep.subr.mxu0 0.0
      %1452 = vmatpush1.msra.mxu0 0.0
      %1453 = vmatprep.subr.mxu0 0.0
      %1454 = vmatpush1.msra.mxu0 0.0
      %1455 = vmatprep.subr.mxu0 0.0
      %1456 = vmatpush1.msra.mxu0 0.0
      %1457 = vmatprep.subr.mxu0 0.0
      %1458 = vmatpush1.msra.mxu0 0.0
      %1459 = vmatprep.subr.mxu0 0.0
      %1460 = vmatpush1.msra.mxu0 0.0
      %1461 = vmatprep.subr.mxu0 0.0
      %1462 = vmatpush1.msra.mxu0 0.0
      %1463 = vmatprep.subr.mxu0 0.0
      %1464 = vmatpush1.msra.mxu0 0.0
      %1465 = vmatprep.subr.mxu0 0.0
      %1466 = vmatpush1.msra.mxu0 0.0
      %1467 = vmatprep.subr.mxu0 0.0
      %1468 = vmatpush1.msra.mxu0 0.0
      %1469 = vmatprep.subr.mxu0 0.0
      %1470 = vmatpush1.msra.mxu0 0.0
      %1471 = vmatprep.subr.mxu0 0.0
      %1472 = vmatpush1.msra.mxu0 0.0
      %1473 = vmatprep.subr.mxu0 0.0
      %1474 = vmatpush1.msra.mxu0 0.0
      %1475 = vmatprep.subr.mxu0 0.0
      %1476 = vmatpush1.msra.mxu0 0.0
      %1477 = vmatprep.subr.mxu0 0.0
      %1478 = vmatpush1.msra.mxu0 0.0
      %1479 = vmatprep.mubr.f32.mxu0 0.0
      %1480 = vmatmul.mubr.f32.gmra.mrb[0].mxu0 %v1386
      %v1481 = vpop.f32.mrb[0].mxu0
      %v1482 = vadd.f32 0.0, %v1481
      %v1483 = vpop.f32.mrb[0].mxu0
      %v1484 = vadd.f32 0.0, %v1483
      %1485 = vmatprep.mubr.f32.mxu0 0.0
      %1486 = vmatmul.mubr.f32.gmra.mrb[0].mxu0 %v1389
      %v1487 = vpop.f32.mrb[0].mxu0
      %v1488 = vadd.f32 0.0, %v1487
      %v1489 = vpop.f32.mrb[0].mxu0
      %v1490 = vadd.f32 0.0, %v1489
      %1491 = vmatprep.mubr.f32.mxu0 0.0
      %1492 = vmatmul.mubr.f32.gmra.mrb[0].mxu0 %v1392
      %v1493 = vpop.f32.mrb[0].mxu0
      %v1494 = vadd.f32 0.0, %v1493
      %v1495 = vpop.f32.mrb[0].mxu0
      %v1496 = vadd.f32 0.0, %v1495
      %1497 = vmatprep.mubr.f32.mxu0 0.0
      %1498 = vmatmul.mubr.f32.gmra.mrb[0].mxu0 %v1395
      %v1499 = vpop.f32.mrb[0].mxu0
      %v1500 = vadd.f32 0.0, %v1499
      %v1501 = vpop.f32.mrb[0].mxu0
      %v1502 = vadd.f32 0.0, %v1501
      %1503 = vmatprep.mubr.f32.mxu0 0.0
      %1504 = vmatmul.mubr.f32.gmra.mrb[0].mxu0 %v1398
      %v1505 = vpop.f32.mrb[0].mxu0
      %v1506 = vadd.f32 0.0, %v1505
      %v1507 = vpop.f32.mrb[0].mxu0
      %v1508 = vadd.f32 0.0, %v1507
      %1509 = vmatprep.mubr.f32.mxu0 0.0
      %1510 = vmatmul.mubr.f32.gmra.mrb[0].mxu0 %v1401
      %v1511 = vpop.f32.mrb[0].mxu0
      %v1512 = vadd.f32 0.0, %v1511
      %v1513 = vpop.f32.mrb[0].mxu0
      %v1514 = vadd.f32 0.0, %v1513
      %1515 = vmatprep.mubr.f32.mxu0 0.0
      %1516 = vmatmul.mubr.f32.gmra.mrb[0].mxu0 %v1404
      %v1517 = vpop.f32.mrb[0].mxu0
      %v1518 = vadd.f32 0.0, %v1517
      %v1519 = vpop.f32.mrb[0].mxu0
      %v1520 = vadd.f32 0.0, %v1519
      %1521 = vmatprep.mubr.f32.mxu0 0.0
      %1522 = vmatmul.mubr.f32.gmra.mrb[0].mxu0 %v1407
      %v1523 = vpop.f32.mrb[0].mxu0
      %v1524 = vadd.f32 0.0, %v1523
      %v1525 = vpop.f32.mrb[0].mxu0
      %v1526 = vadd.f32 0.0, %v1525
      %1527 = vdwg.mxu0
      %v1528 = vld [vmem:[#allocation3] sm:$0xff]
      %v1529 = vld [vmem:[#allocation3 + $0x8] sm:$0xff]
      %v1530 = vld [vmem:[#allocation3 + $0x10] sm:$0xff]
      %v1531 = vld [vmem:[#allocation3 + $0x18] sm:$0xff]
      %v1532 = vld [vmem:[#allocation3 + $0x20] sm:$0xff]
      %v1533 = vld [vmem:[#allocation3 + $0x28] sm:$0xff]
      %v1534 = vld [vmem:[#allocation3 + $0x30] sm:$0xff]
      %v1535 = vld [vmem:[#allocation3 + $0x38] sm:$0xff]
      %v1536 = vld [vmem:[#allocation3 + $0x40] sm:$0xff]
      %v1537 = vld [vmem:[#allocation3 + $0x48] sm:$0xff]
      %v1538 = vld [vmem:[#allocation3 + $0x50] sm:$0xff]
      %v1539 = vld [vmem:[#allocation3 + $0x58] sm:$0xff]
      %v1540 = vld [vmem:[#allocation3 + $0x60] sm:$0xff]
      %v1541 = vld [vmem:[#allocation3 + $0x68] sm:$0xff]
      %v1542 = vld [vmem:[#allocation3 + $0x70] sm:$0xff]
      %v1543 = vld [vmem:[#allocation3 + $0x78] sm:$0xff]
      %v1544 = vadd.f32 %v1528, %v1482
      %v1545 = vadd.f32 %v1529, %v1484
      %v1546 = vadd.f32 %v1530, %v1488
      %v1547 = vadd.f32 %v1531, %v1490
      %v1548 = vadd.f32 %v1532, %v1494
      %v1549 = vadd.f32 %v1533, %v1496
      %v1550 = vadd.f32 %v1534, %v1500
      %v1551 = vadd.f32 %v1535, %v1502
      %v1552 = vadd.f32 %v1536, %v1506
      %v1553 = vadd.f32 %v1537, %v1508
      %v1554 = vadd.f32 %v1538, %v1512
      %v1555 = vadd.f32 %v1539, %v1514
      %v1556 = vadd.f32 %v1540, %v1518
      %v1557 = vadd.f32 %v1541, %v1520
      %v1558 = vadd.f32 %v1542, %v1524
      %v1559 = vadd.f32 %v1543, %v1526
      %1560 = vst [vmem:[#allocation3] sm:$0xff] %v1544
      %1561 = vst [vmem:[#allocation3 + $0x8] sm:$0xff] %v1545
      %1562 = vst [vmem:[#allocation3 + $0x10] sm:$0xff] %v1546
      %1563 = vst [vmem:[#allocation3 + $0x18] sm:$0xff] %v1547
      %1564 = vst [vmem:[#allocation3 + $0x20] sm:$0xff] %v1548
      %1565 = vst [vmem:[#allocation3 + $0x28] sm:$0xff] %v1549
      %1566 = vst [vmem:[#allocation3 + $0x30] sm:$0xff] %v1550
      %1567 = vst [vmem:[#allocation3 + $0x38] sm:$0xff] %v1551
      %1568 = vst [vmem:[#allocation3 + $0x40] sm:$0xff] %v1552
      %1569 = vst [vmem:[#allocation3 + $0x48] sm:$0xff] %v1553
      %1570 = vst [vmem:[#allocation3 + $0x50] sm:$0xff] %v1554
      %1571 = vst [vmem:[#allocation3 + $0x58] sm:$0xff] %v1555
      %1572 = vst [vmem:[#allocation3 + $0x60] sm:$0xff] %v1556
      %1573 = vst [vmem:[#allocation3 + $0x68] sm:$0xff] %v1557
      %1574 = vst [vmem:[#allocation3 + $0x70] sm:$0xff] %v1558
      %1575 = vst [vmem:[#allocation3 + $0x78] sm:$0xff] %v1559
      %v1576 = vld [vmem:[#allocation2 + $0x4] sm:$0xff]
      %v1577 = vld [vmem:[#allocation2 + $0xc] sm:$0xf]
      %v1580 = vcombine.high %v1576, %v1576
      %1581 = vrot.lane.b32.xlu0 %v1576, 113
      %v1582 = vpop.permute.xlu0 %1581
      %1583 = vrot.lane.b32.xlu0 %v1580, 113
      %v1584 = vpop.permute.xlu0 %1583
      %1585 = vrot.lane.b32.xlu0 %v1577, 113
      %v1586 = vpop.permute.xlu0 %1585
      %vm1587 = vcmask 924672
      %v1588 = vsel %vm1587, %v1582, %v1584
      %v1589 = vsel %vm1587, %v1584, %v1586
      %v1592 = vsel %vm318, %v1588, 0.0
      %v1593 = vsel %vm319, %v1589, 0.0
      %s1594 = scalar_lea.vmem %s1, 384
      %v1595 = vld [vmem:[%s1594] sm:$0xff]
      %v1596 = vld [vmem:[%s1594 + $0x8] sm:$0xff]
      %v1597 = vld [vmem:[%s1594 + $0x10] sm:$0xff]
      %v1598 = vld [vmem:[%s1594 + $0x18] sm:$0xff]
      %v1599 = vld [vmem:[%s1594 + $0x20] sm:$0xff]
      %v1600 = vld [vmem:[%s1594 + $0x28] sm:$0xff]
      %v1601 = vld [vmem:[%s1594 + $0x30] sm:$0xff]
      %v1602 = vld [vmem:[%s1594 + $0x38] sm:$0xff]
      %v1604 = vsel %vm344, %v1595, 0
      %v1607 = vsel %vm344, %v1596, 0
      %v1610 = vsel %vm344, %v1597, 0
      %v1613 = vsel %vm344, %v1598, 0
      %v1616 = vsel %vm344, %v1599, 0
      %v1619 = vsel %vm344, %v1600, 0
      %v1622 = vsel %vm344, %v1601, 0
      %v1625 = vsel %vm344, %v1602, 0
      %v1628 = vsel %vm369, %v1592, 0
      %v1631 = vsel %vm369, %v1593, 0
      %1633 = vmatprep.subr.mxu0 %v1631
      %1634 = vmatpush1.msra.mxu0 %v1628
      %1635 = vmatprep.subr.mxu0 0.0
      %1636 = vmatpush1.msra.mxu0 0.0
      %1637 = vmatprep.subr.mxu0 0.0
      %1638 = vmatpush1.msra.mxu0 0.0
      %1639 = vmatprep.subr.mxu0 0.0
      %1640 = vmatpush1.msra.mxu0 0.0
      %1641 = vmatprep.subr.mxu0 0.0
      %1642 = vmatpush1.msra.mxu0 0.0
      %1643 = vmatprep.subr.mxu0 0.0
      %1644 = vmatpush1.msra.mxu0 0.0
      %1645 = vmatprep.subr.mxu0 0.0
      %1646 = vmatpush1.msra.mxu0 0.0
      %1647 = vmatprep.subr.mxu0 0.0
      %1648 = vmatpush1.msra.mxu0 0.0
      %1649 = vmatprep.subr.mxu0 0.0
      %1650 = vmatpush1.msra.mxu0 0.0
      %1651 = vmatprep.subr.mxu0 0.0
      %1652 = vmatpush1.msra.mxu0 0.0
      %1653 = vmatprep.subr.mxu0 0.0
      %1654 = vmatpush1.msra.mxu0 0.0
      %1655 = vmatprep.subr.mxu0 0.0
      %1656 = vmatpush1.msra.mxu0 0.0
      %1657 = vmatprep.subr.mxu0 0.0
      %1658 = vmatpush1.msra.mxu0 0.0
      %1659 = vmatprep.subr.mxu0 0.0
      %1660 = vmatpush1.msra.mxu0 0.0
      %1661 = vmatprep.subr.mxu0 0.0
      %1662 = vmatpush1.msra.mxu0 0.0
      %1663 = vmatprep.subr.mxu0 0.0
      %1664 = vmatpush1.msra.mxu0 0.0
      %1665 = vmatprep.subr.mxu0 0.0
      %1666 = vmatpush1.msra.mxu0 0.0
      %1667 = vmatprep.subr.mxu0 0.0
      %1668 = vmatpush1.msra.mxu0 0.0
      %1669 = vmatprep.subr.mxu0 0.0
      %1670 = vmatpush1.msra.mxu0 0.0
      %1671 = vmatprep.subr.mxu0 0.0
      %1672 = vmatpush1.msra.mxu0 0.0
      %1673 = vmatprep.subr.mxu0 0.0
      %1674 = vmatpush1.msra.mxu0 0.0
      %1675 = vmatprep.subr.mxu0 0.0
      %1676 = vmatpush1.msra.mxu0 0.0
      %1677 = vmatprep.subr.mxu0 0.0
      %1678 = vmatpush1.msra.mxu0 0.0
      %1679 = vmatprep.subr.mxu0 0.0
      %1680 = vmatpush1.msra.mxu0 0.0
      %1681 = vmatprep.subr.mxu0 0.0
      %1682 = vmatpush1.msra.mxu0 0.0
      %1683 = vmatprep.subr.mxu0 0.0
      %1684 = vmatpush1.msra.mxu0 0.0
      %1685 = vmatprep.subr.mxu0 0.0
      %1686 = vmatpush1.msra.mxu0 0.0
      %1687 = vmatprep.subr.mxu0 0.0
      %1688 = vmatpush1.msra.mxu0 0.0
      %1689 = vmatprep.subr.mxu0 0.0
      %1690 = vmatpush1.msra.mxu0 0.0
      %1691 = vmatprep.subr.mxu0 0.0
      %1692 = vmatpush1.msra.mxu0 0.0
      %1693 = vmatprep.subr.mxu0 0.0
      %1694 = vmatpush1.msra.mxu0 0.0
      %1695 = vmatprep.subr.mxu0 0.0
      %1696 = vmatpush1.msra.mxu0 0.0
      %1697 = vmatprep.mubr.f32.mxu0 0.0
      %1698 = vmatmul.mubr.f32.gmra.mrb[0].mxu0 %v1604
      %v1699 = vpop.f32.mrb[0].mxu0
      %v1700 = vadd.f32 0.0, %v1699
      %v1701 = vpop.f32.mrb[0].mxu0
      %v1702 = vadd.f32 0.0, %v1701
      %1703 = vmatprep.mubr.f32.mxu0 0.0
      %1704 = vmatmul.mubr.f32.gmra.mrb[0].mxu0 %v1607
      %v1705 = vpop.f32.mrb[0].mxu0
      %v1706 = vadd.f32 0.0, %v1705
      %v1707 = vpop.f32.mrb[0].mxu0
      %v1708 = vadd.f32 0.0, %v1707
      %1709 = vmatprep.mubr.f32.mxu0 0.0
      %1710 = vmatmul.mubr.f32.gmra.mrb[0].mxu0 %v1610
      %v1711 = vpop.f32.mrb[0].mxu0
      %v1712 = vadd.f32 0.0, %v1711
      %v1713 = vpop.f32.mrb[0].mxu0
      %v1714 = vadd.f32 0.0, %v1713
      %1715 = vmatprep.mubr.f32.mxu0 0.0
      %1716 = vmatmul.mubr.f32.gmra.mrb[0].mxu0 %v1613
      %v1717 = vpop.f32.mrb[0].mxu0
      %v1718 = vadd.f32 0.0, %v1717
      %v1719 = vpop.f32.mrb[0].mxu0
      %v1720 = vadd.f32 0.0, %v1719
      %1721 = vmatprep.mubr.f32.mxu0 0.0
      %1722 = vmatmul.mubr.f32.gmra.mrb[0].mxu0 %v1616
      %v1723 = vpop.f32.mrb[0].mxu0
      %v1724 = vadd.f32 0.0, %v1723
      %v1725 = vpop.f32.mrb[0].mxu0
      %v1726 = vadd.f32 0.0, %v1725
      %1727 = vmatprep.mubr.f32.mxu0 0.0
      %1728 = vmatmul.mubr.f32.gmra.mrb[0].mxu0 %v1619
      %v1729 = vpop.f32.mrb[0].mxu0
      %v1730 = vadd.f32 0.0, %v1729
      %v1731 = vpop.f32.mrb[0].mxu0
      %v1732 = vadd.f32 0.0, %v1731
      %1733 = vmatprep.mubr.f32.mxu0 0.0
      %1734 = vmatmul.mubr.f32.gmra.mrb[0].mxu0 %v1622
      %v1735 = vpop.f32.mrb[0].mxu0
      %v1736 = vadd.f32 0.0, %v1735
      %v1737 = vpop.f32.mrb[0].mxu0
      %v1738 = vadd.f32 0.0, %v1737
      %1739 = vmatprep.mubr.f32.mxu0 0.0
      %1740 = vmatmul.mubr.f32.gmra.mrb[0].mxu0 %v1625
      %v1741 = vpop.f32.mrb[0].mxu0
      %v1742 = vadd.f32 0.0, %v1741
      %v1743 = vpop.f32.mrb[0].mxu0
      %v1744 = vadd.f32 0.0, %v1743
      %1745 = vdwg.mxu0
      %v1746 = vld [vmem:[#allocation3] sm:$0xff]
      %v1747 = vld [vmem:[#allocation3 + $0x8] sm:$0xff]
      %v1748 = vld [vmem:[#allocation3 + $0x10] sm:$0xff]
      %v1749 = vld [vmem:[#allocation3 + $0x18] sm:$0xff]
      %v1750 = vld [vmem:[#allocation3 + $0x20] sm:$0xff]
      %v1751 = vld [vmem:[#allocation3 + $0x28] sm:$0xff]
      %v1752 = vld [vmem:[#allocation3 + $0x30] sm:$0xff]
      %v1753 = vld [vmem:[#allocation3 + $0x38] sm:$0xff]
      %v1754 = vld [vmem:[#allocation3 + $0x40] sm:$0xff]
      %v1755 = vld [vmem:[#allocation3 + $0x48] sm:$0xff]
      %v1756 = vld [vmem:[#allocation3 + $0x50] sm:$0xff]
      %v1757 = vld [vmem:[#allocation3 + $0x58] sm:$0xff]
      %v1758 = vld [vmem:[#allocation3 + $0x60] sm:$0xff]
      %v1759 = vld [vmem:[#allocation3 + $0x68] sm:$0xff]
      %v1760 = vld [vmem:[#allocation3 + $0x70] sm:$0xff]
      %v1761 = vld [vmem:[#allocation3 + $0x78] sm:$0xff]
      %v1762 = vadd.f32 %v1746, %v1700
      %v1763 = vadd.f32 %v1747, %v1702
      %v1764 = vadd.f32 %v1748, %v1706
      %v1765 = vadd.f32 %v1749, %v1708
      %v1766 = vadd.f32 %v1750, %v1712
      %v1767 = vadd.f32 %v1751, %v1714
      %v1768 = vadd.f32 %v1752, %v1718
      %v1769 = vadd.f32 %v1753, %v1720
      %v1770 = vadd.f32 %v1754, %v1724
      %v1771 = vadd.f32 %v1755, %v1726
      %v1772 = vadd.f32 %v1756, %v1730
      %v1773 = vadd.f32 %v1757, %v1732
      %v1774 = vadd.f32 %v1758, %v1736
      %v1775 = vadd.f32 %v1759, %v1738
      %v1776 = vadd.f32 %v1760, %v1742
      %v1777 = vadd.f32 %v1761, %v1744
      %1778 = vst [vmem:[#allocation3] sm:$0xff] %v1762
      %1779 = vst [vmem:[#allocation3 + $0x8] sm:$0xff] %v1763
      %1780 = vst [vmem:[#allocation3 + $0x10] sm:$0xff] %v1764
      %1781 = vst [vmem:[#allocation3 + $0x18] sm:$0xff] %v1765
      %1782 = vst [vmem:[#allocation3 + $0x20] sm:$0xff] %v1766
      %1783 = vst [vmem:[#allocation3 + $0x28] sm:$0xff] %v1767
      %1784 = vst [vmem:[#allocation3 + $0x30] sm:$0xff] %v1768
      %1785 = vst [vmem:[#allocation3 + $0x38] sm:$0xff] %v1769
      %1786 = vst [vmem:[#allocation3 + $0x40] sm:$0xff] %v1770
      %1787 = vst [vmem:[#allocation3 + $0x48] sm:$0xff] %v1771
      %1788 = vst [vmem:[#allocation3 + $0x50] sm:$0xff] %v1772
      %1789 = vst [vmem:[#allocation3 + $0x58] sm:$0xff] %v1773
      %1790 = vst [vmem:[#allocation3 + $0x60] sm:$0xff] %v1774
      %1791 = vst [vmem:[#allocation3 + $0x68] sm:$0xff] %v1775
      %1792 = vst [vmem:[#allocation3 + $0x70] sm:$0xff] %v1776
      %1793 = vst [vmem:[#allocation3 + $0x78] sm:$0xff] %v1777
      %v1794 = vld [vmem:[#allocation2 + $0x4] sm:$0xff]
      %v1795 = vld [vmem:[#allocation2 + $0xc] sm:$0xf]
      %s1796 = scalar_lea.vmem %s1, 448
      %v1797 = vld [vmem:[%s1796] sm:$0xff]
      %v1798 = vld [vmem:[%s1796 + $0x8] sm:$0xff]
      %v1799 = vld [vmem:[%s1796 + $0x10] sm:$0xff]
      %v1800 = vld [vmem:[%s1796 + $0x18] sm:$0xff]
      %v1801 = vld [vmem:[%s1796 + $0x20] sm:$0xff]
      %v1802 = vld [vmem:[%s1796 + $0x28] sm:$0xff]
      %v1803 = vld [vmem:[%s1796 + $0x30] sm:$0xff]
      %v1804 = vld [vmem:[%s1796 + $0x38] sm:$0xff]
      %v1807 = vcombine.high %v1794, %v1794
      %1808 = vrot.lane.b32.xlu0 %v1794, 112
      %v1809 = vpop.permute.xlu0 %1808
      %1810 = vrot.lane.b32.xlu0 %v1807, 112
      %v1811 = vpop.permute.xlu0 %1810
      %1812 = vrot.lane.b32.xlu0 %v1795, 112
      %v1813 = vpop.permute.xlu0 %1812
      %vm1814 = vcmask 916480
      %v1815 = vsel %vm1814, %v1809, %v1811
      %v1816 = vsel %vm1814, %v1811, %v1813
      %v1818 = vsel %vm344, %v1797, 0
      %v1821 = vsel %vm344, %v1798, 0
      %v1824 = vsel %vm344, %v1799, 0
      %v1827 = vsel %vm344, %v1800, 0
      %v1830 = vsel %vm344, %v1801, 0
      %v1833 = vsel %vm344, %v1802, 0
      %v1836 = vsel %vm344, %v1803, 0
      %v1839 = vsel %vm344, %v1804, 0
      %v1841 = vsel %vm369, %v1815, 0
      %v1843 = vsel %vm369, %v1816, 0
      %1845 = vmatprep.subr.mxu0 %v1843
      %1846 = vmatpush1.msra.mxu0 %v1841
      %1847 = vmatprep.subr.mxu0 0.0
      %1848 = vmatpush1.msra.mxu0 0.0
      %1849 = vmatprep.subr.mxu0 0.0
      %1850 = vmatpush1.msra.mxu0 0.0
      %1851 = vmatprep.subr.mxu0 0.0
      %1852 = vmatpush1.msra.mxu0 0.0
      %1853 = vmatprep.subr.mxu0 0.0
      %1854 = vmatpush1.msra.mxu0 0.0
      %1855 = vmatprep.subr.mxu0 0.0
      %1856 = vmatpush1.msra.mxu0 0.0
      %1857 = vmatprep.subr.mxu0 0.0
      %1858 = vmatpush1.msra.mxu0 0.0
      %1859 = vmatprep.subr.mxu0 0.0
      %1860 = vmatpush1.msra.mxu0 0.0
      %1861 = vmatprep.subr.mxu0 0.0
      %1862 = vmatpush1.msra.mxu0 0.0
      %1863 = vmatprep.subr.mxu0 0.0
      %1864 = vmatpush1.msra.mxu0 0.0
      %1865 = vmatprep.subr.mxu0 0.0
      %1866 = vmatpush1.msra.mxu0 0.0
      %1867 = vmatprep.subr.mxu0 0.0
      %1868 = vmatpush1.msra.mxu0 0.0
      %1869 = vmatprep.subr.mxu0 0.0
      %1870 = vmatpush1.msra.mxu0 0.0
      %1871 = vmatprep.subr.mxu0 0.0
      %1872 = vmatpush1.msra.mxu0 0.0
      %1873 = vmatprep.subr.mxu0 0.0
      %1874 = vmatpush1.msra.mxu0 0.0
      %1875 = vmatprep.subr.mxu0 0.0
      %1876 = vmatpush1.msra.mxu0 0.0
      %1877 = vmatprep.subr.mxu0 0.0
      %1878 = vmatpush1.msra.mxu0 0.0
      %1879 = vmatprep.subr.mxu0 0.0
      %1880 = vmatpush1.msra.mxu0 0.0
      %1881 = vmatprep.subr.mxu0 0.0
      %1882 = vmatpush1.msra.mxu0 0.0
      %1883 = vmatprep.subr.mxu0 0.0
      %1884 = vmatpush1.msra.mxu0 0.0
      %1885 = vmatprep.subr.mxu0 0.0
      %1886 = vmatpush1.msra.mxu0 0.0
      %1887 = vmatprep.subr.mxu0 0.0
      %1888 = vmatpush1.msra.mxu0 0.0
      %1889 = vmatprep.subr.mxu0 0.0
      %1890 = vmatpush1.msra.mxu0 0.0
      %1891 = vmatprep.subr.mxu0 0.0
      %1892 = vmatpush1.msra.mxu0 0.0
      %1893 = vmatprep.subr.mxu0 0.0
      %1894 = vmatpush1.msra.mxu0 0.0
      %1895 = vmatprep.subr.mxu0 0.0
      %1896 = vmatpush1.msra.mxu0 0.0
      %1897 = vmatprep.subr.mxu0 0.0
      %1898 = vmatpush1.msra.mxu0 0.0
      %1899 = vmatprep.subr.mxu0 0.0
      %1900 = vmatpush1.msra.mxu0 0.0
      %1901 = vmatprep.subr.mxu0 0.0
      %1902 = vmatpush1.msra.mxu0 0.0
      %1903 = vmatprep.subr.mxu0 0.0
      %1904 = vmatpush1.msra.mxu0 0.0
      %1905 = vmatprep.subr.mxu0 0.0
      %1906 = vmatpush1.msra.mxu0 0.0
      %1907 = vmatprep.subr.mxu0 0.0
      %1908 = vmatpush1.msra.mxu0 0.0
      %1909 = vmatprep.mubr.f32.mxu0 0.0
      %1910 = vmatmul.mubr.f32.gmra.mrb[0].mxu0 %v1818
      %v1911 = vpop.f32.mrb[0].mxu0
      %v1912 = vadd.f32 0.0, %v1911
      %v1913 = vpop.f32.mrb[0].mxu0
      %v1914 = vadd.f32 0.0, %v1913
      %1915 = vmatprep.mubr.f32.mxu0 0.0
      %1916 = vmatmul.mubr.f32.gmra.mrb[0].mxu0 %v1821
      %v1917 = vpop.f32.mrb[0].mxu0
      %v1918 = vadd.f32 0.0, %v1917
      %v1919 = vpop.f32.mrb[0].mxu0
      %v1920 = vadd.f32 0.0, %v1919
      %1921 = vmatprep.mubr.f32.mxu0 0.0
      %1922 = vmatmul.mubr.f32.gmra.mrb[0].mxu0 %v1824
      %v1923 = vpop.f32.mrb[0].mxu0
      %v1924 = vadd.f32 0.0, %v1923
      %v1925 = vpop.f32.mrb[0].mxu0
      %v1926 = vadd.f32 0.0, %v1925
      %1927 = vmatprep.mubr.f32.mxu0 0.0
      %1928 = vmatmul.mubr.f32.gmra.mrb[0].mxu0 %v1827
      %v1929 = vpop.f32.mrb[0].mxu0
      %v1930 = vadd.f32 0.0, %v1929
      %v1931 = vpop.f32.mrb[0].mxu0
      %v1932 = vadd.f32 0.0, %v1931
      %1933 = vmatprep.mubr.f32.mxu0 0.0
      %1934 = vmatmul.mubr.f32.gmra.mrb[0].mxu0 %v1830
      %v1935 = vpop.f32.mrb[0].mxu0
      %v1936 = vadd.f32 0.0, %v1935
      %v1937 = vpop.f32.mrb[0].mxu0
      %v1938 = vadd.f32 0.0, %v1937
      %1939 = vmatprep.mubr.f32.mxu0 0.0
      %1940 = vmatmul.mubr.f32.gmra.mrb[0].mxu0 %v1833
      %v1941 = vpop.f32.mrb[0].mxu0
      %v1942 = vadd.f32 0.0, %v1941
      %v1943 = vpop.f32.mrb[0].mxu0
      %v1944 = vadd.f32 0.0, %v1943
      %1945 = vmatprep.mubr.f32.mxu0 0.0
      %1946 = vmatmul.mubr.f32.gmra.mrb[0].mxu0 %v1836
      %v1947 = vpop.f32.mrb[0].mxu0
      %v1948 = vadd.f32 0.0, %v1947
      %v1949 = vpop.f32.mrb[0].mxu0
      %v1950 = vadd.f32 0.0, %v1949
      %1951 = vmatprep.mubr.f32.mxu0 0.0
      %1952 = vmatmul.mubr.f32.gmra.mrb[0].mxu0 %v1839
      %v1953 = vpop.f32.mrb[0].mxu0
      %v1954 = vadd.f32 0.0, %v1953
      %v1955 = vpop.f32.mrb[0].mxu0
      %v1956 = vadd.f32 0.0, %v1955
      %1957 = vdwg.mxu0
      %v1958 = vld [vmem:[#allocation3] sm:$0xff]
      %v1959 = vld [vmem:[#allocation3 + $0x8] sm:$0xff]
      %v1960 = vld [vmem:[#allocation3 + $0x10] sm:$0xff]
      %v1961 = vld [vmem:[#allocation3 + $0x18] sm:$0xff]
      %v1962 = vld [vmem:[#allocation3 + $0x20] sm:$0xff]
      %v1963 = vld [vmem:[#allocation3 + $0x28] sm:$0xff]
      %v1964 = vld [vmem:[#allocation3 + $0x30] sm:$0xff]
      %v1965 = vld [vmem:[#allocation3 + $0x38] sm:$0xff]
      %v1966 = vld [vmem:[#allocation3 + $0x40] sm:$0xff]
      %v1967 = vld [vmem:[#allocation3 + $0x48] sm:$0xff]
      %v1968 = vld [vmem:[#allocation3 + $0x50] sm:$0xff]
      %v1969 = vld [vmem:[#allocation3 + $0x58] sm:$0xff]
      %v1970 = vld [vmem:[#allocation3 + $0x60] sm:$0xff]
      %v1971 = vld [vmem:[#allocation3 + $0x68] sm:$0xff]
      %v1972 = vld [vmem:[#allocation3 + $0x70] sm:$0xff]
      %v1973 = vld [vmem:[#allocation3 + $0x78] sm:$0xff]
      %v1974 = vadd.f32 %v1958, %v1912
      %v1975 = vadd.f32 %v1959, %v1914
      %v1976 = vadd.f32 %v1960, %v1918
      %v1977 = vadd.f32 %v1961, %v1920
      %v1978 = vadd.f32 %v1962, %v1924
      %v1979 = vadd.f32 %v1963, %v1926
      %v1980 = vadd.f32 %v1964, %v1930
      %v1981 = vadd.f32 %v1965, %v1932
      %v1982 = vadd.f32 %v1966, %v1936
      %v1983 = vadd.f32 %v1967, %v1938
      %v1984 = vadd.f32 %v1968, %v1942
      %v1985 = vadd.f32 %v1969, %v1944
      %v1986 = vadd.f32 %v1970, %v1948
      %v1987 = vadd.f32 %v1971, %v1950
      %v1988 = vadd.f32 %v1972, %v1954
      %v1989 = vadd.f32 %v1973, %v1956
      %1990 = vst [vmem:[#allocation3] sm:$0xff] %v1974
      %1991 = vst [vmem:[#allocation3 + $0x8] sm:$0xff] %v1975
      %1992 = vst [vmem:[#allocation3 + $0x10] sm:$0xff] %v1976
      %1993 = vst [vmem:[#allocation3 + $0x18] sm:$0xff] %v1977
      %1994 = vst [vmem:[#allocation3 + $0x20] sm:$0xff] %v1978
      %1995 = vst [vmem:[#allocation3 + $0x28] sm:$0xff] %v1979
      %1996 = vst [vmem:[#allocation3 + $0x30] sm:$0xff] %v1980
      %1997 = vst [vmem:[#allocation3 + $0x38] sm:$0xff] %v1981
      %1998 = vst [vmem:[#allocation3 + $0x40] sm:$0xff] %v1982
      %1999 = vst [vmem:[#allocation3 + $0x48] sm:$0xff] %v1983
      %2000 = vst [vmem:[#allocation3 + $0x50] sm:$0xff] %v1984
      %2001 = vst [vmem:[#allocation3 + $0x58] sm:$0xff] %v1985
      %2002 = vst [vmem:[#allocation3 + $0x60] sm:$0xff] %v1986
      %2003 = vst [vmem:[#allocation3 + $0x68] sm:$0xff] %v1987
      %2004 = vst [vmem:[#allocation3 + $0x70] sm:$0xff] %v1988
      %2005 = vst [vmem:[#allocation3 + $0x78] sm:$0xff] %v1989
      %v2006 = vld [vmem:[#allocation2 + $0x4] sm:$0xff]
      %v2007 = vld [vmem:[#allocation2 + $0xc] sm:$0xf]
      %v2010 = vcombine.high %v2006, %v2006
      %2011 = vrot.lane.b32.xlu0 %v2006, 111
      %v2012 = vpop.permute.xlu0 %2011
      %2013 = vrot.lane.b32.xlu0 %v2010, 111
      %v2014 = vpop.permute.xlu0 %2013
      %2015 = vrot.lane.b32.xlu0 %v2007, 111
      %v2016 = vpop.permute.xlu0 %2015
      %vm2017 = vcmask 908288
      %v2018 = vsel %vm2017, %v2012, %v2014
      %v2019 = vsel %vm2017, %v2014, %v2016
      %v2022 = vsel %vm721, %v2018, 0.0
      %v2023 = vsel %vm722, %v2019, 0.0
      %s2024 = scalar_lea.vmem %s1, 512
      %v2025 = vld [vmem:[%s2024] sm:$0xff]
      %v2026 = vld [vmem:[%s2024 + $0x8] sm:$0xff]
      %v2027 = vld [vmem:[%s2024 + $0x10] sm:$0xff]
      %v2028 = vld [vmem:[%s2024 + $0x18] sm:$0xff]
      %v2029 = vld [vmem:[%s2024 + $0x20] sm:$0xff]
      %v2030 = vld [vmem:[%s2024 + $0x28] sm:$0xff]
      %v2031 = vld [vmem:[%s2024 + $0x30] sm:$0xff]
      %v2032 = vld [vmem:[%s2024 + $0x38] sm:$0xff]
      %v2034 = vsel %vm344, %v2025, 0
      %v2037 = vsel %vm344, %v2026, 0
      %v2040 = vsel %vm344, %v2027, 0
      %v2043 = vsel %vm344, %v2028, 0
      %v2046 = vsel %vm344, %v2029, 0
      %v2049 = vsel %vm344, %v2030, 0
      %v2052 = vsel %vm344, %v2031, 0
      %v2055 = vsel %vm344, %v2032, 0
      %v2058 = vsel %vm369, %v2022, 0
      %v2061 = vsel %vm369, %v2023, 0
      %2063 = vmatprep.subr.mxu0 %v2061
      %2064 = vmatpush1.msra.mxu0 %v2058
      %2065 = vmatprep.subr.mxu0 0.0
      %2066 = vmatpush1.msra.mxu0 0.0
      %2067 = vmatprep.subr.mxu0 0.0
      %2068 = vmatpush1.msra.mxu0 0.0
      %2069 = vmatprep.subr.mxu0 0.0
      %2070 = vmatpush1.msra.mxu0 0.0
      %2071 = vmatprep.subr.mxu0 0.0
      %2072 = vmatpush1.msra.mxu0 0.0
      %2073 = vmatprep.subr.mxu0 0.0
      %2074 = vmatpush1.msra.mxu0 0.0
      %2075 = vmatprep.subr.mxu0 0.0
      %2076 = vmatpush1.msra.mxu0 0.0
      %2077 = vmatprep.subr.mxu0 0.0
      %2078 = vmatpush1.msra.mxu0 0.0
      %2079 = vmatprep.subr.mxu0 0.0
      %2080 = vmatpush1.msra.mxu0 0.0
      %2081 = vmatprep.subr.mxu0 0.0
      %2082 = vmatpush1.msra.mxu0 0.0
      %2083 = vmatprep.subr.mxu0 0.0
      %2084 = vmatpush1.msra.mxu0 0.0
      %2085 = vmatprep.subr.mxu0 0.0
      %2086 = vmatpush1.msra.mxu0 0.0
      %2087 = vmatprep.subr.mxu0 0.0
      %2088 = vmatpush1.msra.mxu0 0.0
      %2089 = vmatprep.subr.mxu0 0.0
      %2090 = vmatpush1.msra.mxu0 0.0
      %2091 = vmatprep.subr.mxu0 0.0
      %2092 = vmatpush1.msra.mxu0 0.0
      %2093 = vmatprep.subr.mxu0 0.0
      %2094 = vmatpush1.msra.mxu0 0.0
      %2095 = vmatprep.subr.mxu0 0.0
      %2096 = vmatpush1.msra.mxu0 0.0
      %2097 = vmatprep.subr.mxu0 0.0
      %2098 = vmatpush1.msra.mxu0 0.0
      %2099 = vmatprep.subr.mxu0 0.0
      %2100 = vmatpush1.msra.mxu0 0.0
      %2101 = vmatprep.subr.mxu0 0.0
      %2102 = vmatpush1.msra.mxu0 0.0
      %2103 = vmatprep.subr.mxu0 0.0
      %2104 = vmatpush1.msra.mxu0 0.0
      %2105 = vmatprep.subr.mxu0 0.0
      %2106 = vmatpush1.msra.mxu0 0.0
      %2107 = vmatprep.subr.mxu0 0.0
      %2108 = vmatpush1.msra.mxu0 0.0
      %2109 = vmatprep.subr.mxu0 0.0
      %2110 = vmatpush1.msra.mxu0 0.0
      %2111 = vmatprep.subr.mxu0 0.0
      %2112 = vmatpush1.msra.mxu0 0.0
      %2113 = vmatprep.subr.mxu0 0.0
      %2114 = vmatpush1.msra.mxu0 0.0
      %2115 = vmatprep.subr.mxu0 0.0
      %2116 = vmatpush1.msra.mxu0 0.0
      %2117 = vmatprep.subr.mxu0 0.0
      %2118 = vmatpush1.msra.mxu0 0.0
      %2119 = vmatprep.subr.mxu0 0.0
      %2120 = vmatpush1.msra.mxu0 0.0
      %2121 = vmatprep.subr.mxu0 0.0
      %2122 = vmatpush1.msra.mxu0 0.0
      %2123 = vmatprep.subr.mxu0 0.0
      %2124 = vmatpush1.msra.mxu0 0.0
      %2125 = vmatprep.subr.mxu0 0.0
      %2126 = vmatpush1.msra.mxu0 0.0
      %2127 = vmatprep.mubr.f32.mxu0 0.0
      %2128 = vmatmul.mubr.f32.gmra.mrb[0].mxu0 %v2034
      %v2129 = vpop.f32.mrb[0].mxu0
      %v2130 = vadd.f32 0.0, %v2129
      %v2131 = vpop.f32.mrb[0].mxu0
      %v2132 = vadd.f32 0.0, %v2131
      %2133 = vmatprep.mubr.f32.mxu0 0.0
      %2134 = vmatmul.mubr.f32.gmra.mrb[0].mxu0 %v2037
      %v2135 = vpop.f32.mrb[0].mxu0
      %v2136 = vadd.f32 0.0, %v2135
      %v2137 = vpop.f32.mrb[0].mxu0
      %v2138 = vadd.f32 0.0, %v2137
      %2139 = vmatprep.mubr.f32.mxu0 0.0
      %2140 = vmatmul.mubr.f32.gmra.mrb[0].mxu0 %v2040
      %v2141 = vpop.f32.mrb[0].mxu0
      %v2142 = vadd.f32 0.0, %v2141
      %v2143 = vpop.f32.mrb[0].mxu0
      %v2144 = vadd.f32 0.0, %v2143
      %2145 = vmatprep.mubr.f32.mxu0 0.0
      %2146 = vmatmul.mubr.f32.gmra.mrb[0].mxu0 %v2043
      %v2147 = vpop.f32.mrb[0].mxu0
      %v2148 = vadd.f32 0.0, %v2147
      %v2149 = vpop.f32.mrb[0].mxu0
      %v2150 = vadd.f32 0.0, %v2149
      %2151 = vmatprep.mubr.f32.mxu0 0.0
      %2152 = vmatmul.mubr.f32.gmra.mrb[0].mxu0 %v2046
      %v2153 = vpop.f32.mrb[0].mxu0
      %v2154 = vadd.f32 0.0, %v2153
      %v2155 = vpop.f32.mrb[0].mxu0
      %v2156 = vadd.f32 0.0, %v2155
      %2157 = vmatprep.mubr.f32.mxu0 0.0
      %2158 = vmatmul.mubr.f32.gmra.mrb[0].mxu0 %v2049
      %v2159 = vpop.f32.mrb[0].mxu0
      %v2160 = vadd.f32 0.0, %v2159
      %v2161 = vpop.f32.mrb[0].mxu0
      %v2162 = vadd.f32 0.0, %v2161
      %2163 = vmatprep.mubr.f32.mxu0 0.0
      %2164 = vmatmul.mubr.f32.gmra.mrb[0].mxu0 %v2052
      %v2165 = vpop.f32.mrb[0].mxu0
      %v2166 = vadd.f32 0.0, %v2165
      %v2167 = vpop.f32.mrb[0].mxu0
      %v2168 = vadd.f32 0.0, %v2167
      %2169 = vmatprep.mubr.f32.mxu0 0.0
      %2170 = vmatmul.mubr.f32.gmra.mrb[0].mxu0 %v2055
      %v2171 = vpop.f32.mrb[0].mxu0
      %v2172 = vadd.f32 0.0, %v2171
      %v2173 = vpop.f32.mrb[0].mxu0
      %v2174 = vadd.f32 0.0, %v2173
      %2175 = vdwg.mxu0
      %v2176 = vld [vmem:[#allocation3] sm:$0xff]
      %v2177 = vld [vmem:[#allocation3 + $0x8] sm:$0xff]
      %v2178 = vld [vmem:[#allocation3 + $0x10] sm:$0xff]
      %v2179 = vld [vmem:[#allocation3 + $0x18] sm:$0xff]
      %v2180 = vld [vmem:[#allocation3 + $0x20] sm:$0xff]
      %v2181 = vld [vmem:[#allocation3 + $0x28] sm:$0xff]
      %v2182 = vld [vmem:[#allocation3 + $0x30] sm:$0xff]
      %v2183 = vld [vmem:[#allocation3 + $0x38] sm:$0xff]
      %v2184 = vld [vmem:[#allocation3 + $0x40] sm:$0xff]
      %v2185 = vld [vmem:[#allocation3 + $0x48] sm:$0xff]
      %v2186 = vld [vmem:[#allocation3 + $0x50] sm:$0xff]
      %v2187 = vld [vmem:[#allocation3 + $0x58] sm:$0xff]
      %v2188 = vld [vmem:[#allocation3 + $0x60] sm:$0xff]
      %v2189 = vld [vmem:[#allocation3 + $0x68] sm:$0xff]
      %v2190 = vld [vmem:[#allocation3 + $0x70] sm:$0xff]
      %v2191 = vld [vmem:[#allocation3 + $0x78] sm:$0xff]
      %v2192 = vadd.f32 %v2176, %v2130
      %v2193 = vadd.f32 %v2177, %v2132
      %v2194 = vadd.f32 %v2178, %v2136
      %v2195 = vadd.f32 %v2179, %v2138
      %v2196 = vadd.f32 %v2180, %v2142
      %v2197 = vadd.f32 %v2181, %v2144
      %v2198 = vadd.f32 %v2182, %v2148
      %v2199 = vadd.f32 %v2183, %v2150
      %v2200 = vadd.f32 %v2184, %v2154
      %v2201 = vadd.f32 %v2185, %v2156
      %v2202 = vadd.f32 %v2186, %v2160
      %v2203 = vadd.f32 %v2187, %v2162
      %v2204 = vadd.f32 %v2188, %v2166
      %v2205 = vadd.f32 %v2189, %v2168
      %v2206 = vadd.f32 %v2190, %v2172
      %v2207 = vadd.f32 %v2191, %v2174
      %2208 = vst [vmem:[#allocation3] sm:$0xff] %v2192
      %2209 = vst [vmem:[#allocation3 + $0x8] sm:$0xff] %v2193
      %2210 = vst [vmem:[#allocation3 + $0x10] sm:$0xff] %v2194
      %2211 = vst [vmem:[#allocation3 + $0x18] sm:$0xff] %v2195
      %2212 = vst [vmem:[#allocation3 + $0x20] sm:$0xff] %v2196
      %2213 = vst [vmem:[#allocation3 + $0x28] sm:$0xff] %v2197
      %2214 = vst [vmem:[#allocation3 + $0x30] sm:$0xff] %v2198
      %2215 = vst [vmem:[#allocation3 + $0x38] sm:$0xff] %v2199
      %2216 = vst [vmem:[#allocation3 + $0x40] sm:$0xff] %v2200
      %2217 = vst [vmem:[#allocation3 + $0x48] sm:$0xff] %v2201
      %2218 = vst [vmem:[#allocation3 + $0x50] sm:$0xff] %v2202
      %2219 = vst [vmem:[#allocation3 + $0x58] sm:$0xff] %v2203
      %2220 = vst [vmem:[#allocation3 + $0x60] sm:$0xff] %v2204
      %2221 = vst [vmem:[#allocation3 + $0x68] sm:$0xff] %v2205
      %2222 = vst [vmem:[#allocation3 + $0x70] sm:$0xff] %v2206
      %2223 = vst [vmem:[#allocation3 + $0x78] sm:$0xff] %v2207
      %v2224 = vld [vmem:[#allocation3] sm:$0xff]
      %v2225 = vld [vmem:[#allocation3 + $0x8] sm:$0xff]
      %v2226 = vld [vmem:[#allocation3 + $0x10] sm:$0xff]
      %v2227 = vld [vmem:[#allocation3 + $0x18] sm:$0xff]
      %v2228 = vld [vmem:[#allocation3 + $0x20] sm:$0xff]
      %v2229 = vld [vmem:[#allocation3 + $0x28] sm:$0xff]
      %v2230 = vld [vmem:[#allocation3 + $0x30] sm:$0xff]
      %v2231 = vld [vmem:[#allocation3 + $0x38] sm:$0xff]
      %v2232 = vld [vmem:[#allocation3 + $0x40] sm:$0xff]
      %v2233 = vld [vmem:[#allocation3 + $0x48] sm:$0xff]
      %v2234 = vld [vmem:[#allocation3 + $0x50] sm:$0xff]
      %v2235 = vld [vmem:[#allocation3 + $0x58] sm:$0xff]
      %v2236 = vld [vmem:[#allocation3 + $0x60] sm:$0xff]
      %v2237 = vld [vmem:[#allocation3 + $0x68] sm:$0xff]
      %v2238 = vld [vmem:[#allocation3 + $0x70] sm:$0xff]
      %v2239 = vld [vmem:[#allocation3 + $0x78] sm:$0xff]
      %v2240 = vld [vmem:[%s2] sm:$0xff]
      %v2241 = vld [vmem:[%s2 + $0x8] sm:$0xff]
      %v2242 = vld [vmem:[%s2 + $0x10] sm:$0xff]
      %v2243 = vld [vmem:[%s2 + $0x18] sm:$0xff]
      %v2244 = vld [vmem:[%s2 + $0x20] sm:$0xff]
      %v2245 = vld [vmem:[%s2 + $0x28] sm:$0xff]
      %v2246 = vld [vmem:[%s2 + $0x30] sm:$0xff]
      %v2247 = vld [vmem:[%s2 + $0x38] sm:$0xff]
      %2249 = vset.pattern.permute.xlu0 0
      %2250 = vperm.xlu0 %2249, %v2240
      %v2251 = vpop.permute.xlu0 %2250
      %2254 = vset.pattern.permute.xlu0 0
      %2255 = vperm.xlu0 %2254, %v2241
      %v2256 = vpop.permute.xlu0 %2255
      %2259 = vset.pattern.permute.xlu0 0
      %2260 = vperm.xlu0 %2259, %v2242
      %v2261 = vpop.permute.xlu0 %2260
      %2264 = vset.pattern.permute.xlu0 0
      %2265 = vperm.xlu0 %2264, %v2243
      %v2266 = vpop.permute.xlu0 %2265
      %2269 = vset.pattern.permute.xlu0 0
      %2270 = vperm.xlu0 %2269, %v2244
      %v2271 = vpop.permute.xlu0 %2270
      %2274 = vset.pattern.permute.xlu0 0
      %2275 = vperm.xlu0 %2274, %v2245
      %v2276 = vpop.permute.xlu0 %2275
      %2279 = vset.pattern.permute.xlu0 0
      %2280 = vperm.xlu0 %2279, %v2246
      %v2281 = vpop.permute.xlu0 %2280
      %2284 = vset.pattern.permute.xlu0 0
      %2285 = vperm.xlu0 %2284, %v2247
      %v2286 = vpop.permute.xlu0 %2285
      %v2288 = vadd.f32 %v2224, %v2251
      %v2289 = vadd.f32 %v2225, %v2251
      %v2290 = vadd.f32 %v2226, %v2256
      %v2291 = vadd.f32 %v2227, %v2256
      %v2292 = vadd.f32 %v2228, %v2261
      %v2293 = vadd.f32 %v2229, %v2261
      %v2294 = vadd.f32 %v2230, %v2266
      %v2295 = vadd.f32 %v2231, %v2266
      %v2296 = vadd.f32 %v2232, %v2271
      %v2297 = vadd.f32 %v2233, %v2271
      %v2298 = vadd.f32 %v2234, %v2276
      %v2299 = vadd.f32 %v2235, %v2276
      %v2300 = vadd.f32 %v2236, %v2281
      %v2301 = vadd.f32 %v2237, %v2281
      %v2302 = vadd.f32 %v2238, %v2286
      %v2303 = vadd.f32 %v2239, %v2286
      %v2304 = vmax.f32 %v2288, 0.0
      %v2305 = vmax.f32 %v2289, 0.0
      %v2306 = vmax.f32 %v2290, 0.0
      %v2307 = vmax.f32 %v2291, 0.0
      %v2308 = vmax.f32 %v2292, 0.0
      %v2309 = vmax.f32 %v2293, 0.0
      %v2310 = vmax.f32 %v2294, 0.0
      %v2311 = vmax.f32 %v2295, 0.0
      %v2312 = vmax.f32 %v2296, 0.0
      %v2313 = vmax.f32 %v2297, 0.0
      %v2314 = vmax.f32 %v2298, 0.0
      %v2315 = vmax.f32 %v2299, 0.0
      %v2316 = vmax.f32 %v2300, 0.0
      %v2317 = vmax.f32 %v2301, 0.0
      %v2318 = vmax.f32 %v2302, 0.0
      %v2319 = vmax.f32 %v2303, 0.0
      %2320 = vst [vmem:[#allocation4] sm:$0xff] %v2304
      %2321 = vst [vmem:[#allocation4 + $0x8] sm:$0xff] %v2305
      %2322 = vst [vmem:[#allocation4 + $0x10] sm:$0xff] %v2306
      %2323 = vst [vmem:[#allocation4 + $0x18] sm:$0xff] %v2307
      %2324 = vst [vmem:[#allocation4 + $0x20] sm:$0xff] %v2308
      %2325 = vst [vmem:[#allocation4 + $0x28] sm:$0xff] %v2309
      %2326 = vst [vmem:[#allocation4 + $0x30] sm:$0xff] %v2310
      %2327 = vst [vmem:[#allocation4 + $0x38] sm:$0xff] %v2311
      %2328 = vst [vmem:[#allocation4 + $0x40] sm:$0xff] %v2312
      %2329 = vst [vmem:[#allocation4 + $0x48] sm:$0xff] %v2313
      %2330 = vst [vmem:[#allocation4 + $0x50] sm:$0xff] %v2314
      %2331 = vst [vmem:[#allocation4 + $0x58] sm:$0xff] %v2315
      %2332 = vst [vmem:[#allocation4 + $0x60] sm:$0xff] %v2316
      %2333 = vst [vmem:[#allocation4 + $0x68] sm:$0xff] %v2317
      %2334 = vst [vmem:[#allocation4 + $0x70] sm:$0xff] %v2318
      %2335 = vst [vmem:[#allocation4 + $0x78] sm:$0xff] %v2319
      %v2336 = vld [vmem:[%s3] sm:$0x1f]
      %v2337 = vld [vmem:[#allocation4] sm:$0xff]
      %v2338 = vld [vmem:[#allocation4 + $0x8] sm:$0xff]
      %v2339 = vld [vmem:[#allocation4 + $0x10] sm:$0xff]
      %v2340 = vld [vmem:[#allocation4 + $0x18] sm:$0xff]
      %v2341 = vld [vmem:[#allocation4 + $0x20] sm:$0xff]
      %v2342 = vld [vmem:[#allocation4 + $0x28] sm:$0xff]
      %v2343 = vld [vmem:[#allocation4 + $0x30] sm:$0xff]
      %v2344 = vld [vmem:[#allocation4 + $0x38] sm:$0xff]
      %v2345 = vld [vmem:[#allocation4 + $0x40] sm:$0xff]
      %v2346 = vld [vmem:[#allocation4 + $0x48] sm:$0xff]
      %v2347 = vld [vmem:[#allocation4 + $0x50] sm:$0xff]
      %v2348 = vld [vmem:[#allocation4 + $0x58] sm:$0xff]
      %v2349 = vld [vmem:[#allocation4 + $0x60] sm:$0xff]
      %v2350 = vld [vmem:[#allocation4 + $0x68] sm:$0xff]
      %v2351 = vld [vmem:[#allocation4 + $0x70] sm:$0xff]
      %v2352 = vld [vmem:[#allocation4 + $0x78] sm:$0xff]
      %v2353 = vld [vmem:[%s4] sm:$0x1f]
      %2355 = vset.pattern.permute.xlu0 0
      %2356 = vperm.xlu0 %2355, %v2353
      %v2357 = vpop.permute.xlu0 %2356
      %vm2359 = vcmask 523264
      %v2361 = vsel %vm2359, %v2336, 0
      %2363 = vmatprep.subr.mxu0 %v2338
      %2364 = vmatpush1.msra.mxu0 %v2337
      %2365 = vmatprep.subr.mxu0 %v2340
      %2366 = vmatpush1.msra.mxu0 %v2339
      %2367 = vmatprep.subr.mxu0 %v2342
      %2368 = vmatpush1.msra.mxu0 %v2341
      %2369 = vmatprep.subr.mxu0 %v2344
      %2370 = vmatpush1.msra.mxu0 %v2343
      %2371 = vmatprep.subr.mxu0 %v2346
      %2372 = vmatpush1.msra.mxu0 %v2345
      %2373 = vmatprep.subr.mxu0 %v2348
      %2374 = vmatpush1.msra.mxu0 %v2347
      %2375 = vmatprep.subr.mxu0 %v2350
      %2376 = vmatpush1.msra.mxu0 %v2349
      %2377 = vmatprep.subr.mxu0 %v2352
      %2378 = vmatpush1.msra.mxu0 %v2351
      %2379 = vmatprep.subr.mxu0 0.0
      %2380 = vmatpush1.msra.mxu0 0.0
      %2381 = vmatprep.subr.mxu0 0.0
      %2382 = vmatpush1.msra.mxu0 0.0
      %2383 = vmatprep.subr.mxu0 0.0
      %2384 = vmatpush1.msra.mxu0 0.0
      %2385 = vmatprep.subr.mxu0 0.0
      %2386 = vmatpush1.msra.mxu0 0.0
      %2387 = vmatprep.subr.mxu0 0.0
      %2388 = vmatpush1.msra.mxu0 0.0
      %2389 = vmatprep.subr.mxu0 0.0
      %2390 = vmatpush1.msra.mxu0 0.0
      %2391 = vmatprep.subr.mxu0 0.0
      %2392 = vmatpush1.msra.mxu0 0.0
      %2393 = vmatprep.subr.mxu0 0.0
      %2394 = vmatpush1.msra.mxu0 0.0
      %2395 = vmatprep.subr.mxu0 0.0
      %2396 = vmatpush1.msra.mxu0 0.0
      %2397 = vmatprep.subr.mxu0 0.0
      %2398 = vmatpush1.msra.mxu0 0.0
      %2399 = vmatprep.subr.mxu0 0.0
      %2400 = vmatpush1.msra.mxu0 0.0
      %2401 = vmatprep.subr.mxu0 0.0
      %2402 = vmatpush1.msra.mxu0 0.0
      %2403 = vmatprep.subr.mxu0 0.0
      %2404 = vmatpush1.msra.mxu0 0.0
      %2405 = vmatprep.subr.mxu0 0.0
      %2406 = vmatpush1.msra.mxu0 0.0
      %2407 = vmatprep.subr.mxu0 0.0
      %2408 = vmatpush1.msra.mxu0 0.0
      %2409 = vmatprep.subr.mxu0 0.0
      %2410 = vmatpush1.msra.mxu0 0.0
      %2411 = vmatprep.subr.mxu0 0.0
      %2412 = vmatpush1.msra.mxu0 0.0
      %2413 = vmatprep.subr.mxu0 0.0
      %2414 = vmatpush1.msra.mxu0 0.0
      %2415 = vmatprep.subr.mxu0 0.0
      %2416 = vmatpush1.msra.mxu0 0.0
      %2417 = vmatprep.subr.mxu0 0.0
      %2418 = vmatpush1.msra.mxu0 0.0
      %2419 = vmatprep.subr.mxu0 0.0
      %2420 = vmatpush1.msra.mxu0 0.0
      %2421 = vmatprep.subr.mxu0 0.0
      %2422 = vmatpush1.msra.mxu0 0.0
      %2423 = vmatprep.subr.mxu0 0.0
      %2424 = vmatpush1.msra.mxu0 0.0
      %2425 = vmatprep.subr.mxu0 0.0
      %2426 = vmatpush1.msra.mxu0 0.0
      %2427 = vmatprep.mubr.f32.mxu0 0.0
      %2428 = vmatmul.mubr.f32.gmra.mrb[0].mxu0 %v2361
      %v2429 = vpop.f32.mrb[0].mxu0
      %v2430 = vadd.f32 %v2357, %v2429
      %v2431 = vpop.f32.mrb[0].mxu0
      %v2432 = vadd.f32 %v2357, %v2431
      %2433 = vdwg.mxu0
      %2434 = vst [vmem:[%s278] sm:$0x1f] %v2430
      %2435 = vst [vmem:[%s278 + $0x8] sm:$0x1f] %v2432
      %v2436 = vld [vmem:[%s5] sm:$0x3]
      %v2437 = vld [vmem:[%s6] sm:$0x3]
      %2439 = vset.pattern.permute.xlu0 0
      %2440 = vperm.xlu0 %2439, %v2437
      %v2441 = vpop.permute.xlu0 %2440
      %v2444 = vcombine.high %v279, %v279
      %v2446 = vsel %vm344, %v2436, 0
      %v2448 = vsel %vm369, %v279, 0
      %v2450 = vsel %vm369, %v2444, 0
      %2452 = vmatprep.subr.mxu0 %v2450
      %2453 = vmatpush1.msra.mxu0 %v2448
      %2454 = vmatprep.subr.mxu0 0.0
      %2455 = vmatpush1.msra.mxu0 0.0
      %2456 = vmatprep.subr.mxu0 0.0
      %2457 = vmatpush1.msra.mxu0 0.0
      %2458 = vmatprep.subr.mxu0 0.0
      %2459 = vmatpush1.msra.mxu0 0.0
      %2460 = vmatprep.subr.mxu0 0.0
      %2461 = vmatpush1.msra.mxu0 0.0
      %2462 = vmatprep.subr.mxu0 0.0
      %2463 = vmatpush1.msra.mxu0 0.0
      %2464 = vmatprep.subr.mxu0 0.0
      %2465 = vmatpush1.msra.mxu0 0.0
      %2466 = vmatprep.subr.mxu0 0.0
      %2467 = vmatpush1.msra.mxu0 0.0
      %2468 = vmatprep.subr.mxu0 0.0
      %2469 = vmatpush1.msra.mxu0 0.0
      %2470 = vmatprep.subr.mxu0 0.0
      %2471 = vmatpush1.msra.mxu0 0.0
      %2472 = vmatprep.subr.mxu0 0.0
      %2473 = vmatpush1.msra.mxu0 0.0
      %2474 = vmatprep.subr.mxu0 0.0
      %2475 = vmatpush1.msra.mxu0 0.0
      %2476 = vmatprep.subr.mxu0 0.0
      %2477 = vmatpush1.msra.mxu0 0.0
      %2478 = vmatprep.subr.mxu0 0.0
      %2479 = vmatpush1.msra.mxu0 0.0
      %2480 = vmatprep.subr.mxu0 0.0
      %2481 = vmatpush1.msra.mxu0 0.0
      %2482 = vmatprep.subr.mxu0 0.0
      %2483 = vmatpush1.msra.mxu0 0.0
      %2484 = vmatprep.subr.mxu0 0.0
      %2485 = vmatpush1.msra.mxu0 0.0
      %2486 = vmatprep.subr.mxu0 0.0
      %2487 = vmatpush1.msra.mxu0 0.0
      %2488 = vmatprep.subr.mxu0 0.0
      %2489 = vmatpush1.msra.mxu0 0.0
      %2490 = vmatprep.subr.mxu0 0.0
      %2491 = vmatpush1.msra.mxu0 0.0
      %2492 = vmatprep.subr.mxu0 0.0
      %2493 = vmatpush1.msra.mxu0 0.0
      %2494 = vmatprep.subr.mxu0 0.0
      %2495 = vmatpush1.msra.mxu0 0.0
      %2496 = vmatprep.subr.mxu0 0.0
      %2497 = vmatpush1.msra.mxu0 0.0
      %2498 = vmatprep.subr.mxu0 0.0
      %2499 = vmatpush1.msra.mxu0 0.0
      %2500 = vmatprep.subr.mxu0 0.0
      %2501 = vmatpush1.msra.mxu0 0.0
      %2502 = vmatprep.subr.mxu0 0.0
      %2503 = vmatpush1.msra.mxu0 0.0
      %2504 = vmatprep.subr.mxu0 0.0
      %2505 = vmatpush1.msra.mxu0 0.0
      %2506 = vmatprep.subr.mxu0 0.0
      %2507 = vmatpush1.msra.mxu0 0.0
      %2508 = vmatprep.subr.mxu0 0.0
      %2509 = vmatpush1.msra.mxu0 0.0
      %2510 = vmatprep.subr.mxu0 0.0
      %2511 = vmatpush1.msra.mxu0 0.0
      %2512 = vmatprep.subr.mxu0 0.0
      %2513 = vmatpush1.msra.mxu0 0.0
      %2514 = vmatprep.subr.mxu0 0.0
      %2515 = vmatpush1.msra.mxu0 0.0
      %2516 = vmatprep.mubr.f32.mxu0 0.0
      %2517 = vmatmul.mubr.f32.gmra.mrb[0].mxu0 %v2446
      %v2518 = vpop.f32.mrb[0].mxu0
      %v2519 = vadd.f32 %v2441, %v2518
      %v2520 = vpop.f32.mrb[0].mxu0
      %v2521 = vadd.f32 %v2441, %v2520
      %2522 = vdwg.mxu0
      %v2525 = vrot.slane %v2519, 3
      %v2526 = vrot.slane %v2521, 3
      %2529 = vst [vmem:[%s278] sm:$0x60] %v2525
      %2530 = vst [vmem:[%s278 + $0x8] sm:$0x60] %v2526
      %p2531 = scmp.lt.s32.totalorder %s18, 1
      %s2532 = scalar_select %p2531, %s18, 1
      %s2533 = smul.addr %s2532, 2
      %s2534 = smul.addr %s2533, 8
      %s2535 = scalar_lea.vmem %s7, %s2534
      // Predicated region
      $region49: #{tpu_custom_call.1} parent=47 // pred_check
        %p2536 = pneg %p188
      $region50: #{tpu_custom_call.1} parent=47 // pred_check_branch
        %2538 = sbr.rel (%p2536) target = $region52
      $region51: #{tpu_custom_call.1} parent=47 // pred_region
        _
      $region52: #{tpu_custom_call.1} parent=47 // pred_fallthru
        _
    $region48: #{tpu_custom_call.1} parent=5 // pred_fallthru
      _
    %p2539 = scmp.le.s32.totalorder 2, %s13
    // Predicated region
    $region53: #{tpu_custom_call.1} parent=5 // pred_check
      %p2540 = pneg %p2539
    $region54: #{tpu_custom_call.1} parent=5 // pred_check_branch
      %2542 = sbr.rel (%p2540) target = $region56
    $region55: #{tpu_custom_call.1} parent=5 // pred_region
      %s2543 = ssub.s32 %s13, 2
      // Predicated region
      $region57: #{tpu_custom_call.1} parent=55 // pred_check
        %p2544 = pneg %p194
      $region58: #{tpu_custom_call.1} parent=55 // pred_check_branch
        %2546 = sbr.rel (%p2544) target = $region60
      $region59: #{tpu_custom_call.1} parent=55 // pred_region
        %p2547 = scmp.lt.s32.totalorder %s19, 1
        %s2548 = scalar_select %p2547, %s19, 1
        %s2549 = smul.addr %s2548, 2
        %s2550 = smul.addr %s2549, 8
        %s2551 = scalar_lea.vmem %s7, %s2550
      $region60: #{tpu_custom_call.1} parent=55 // pred_fallthru
        _
    $region56: #{tpu_custom_call.1} parent=5 // pred_fallthru
      _
  $region6: #{tpu_custom_call.1} parent=0 // loop_footer
    %s17 = sadd.s32 1, %s13
  $region7: #{tpu_custom_call.1} parent=0 // loop_footer_branch
    %12 = sbr.rel target = $region3
  $region8: #{tpu_custom_call.1} parent=0 // loop_exit
    _

</llo_original>
